<compile_context>
chip_gen: v7x
topology: tpu7x:2x2x1
jax: 0.10.0
libtpu: 0.0.40
codegen_flags: <defaults>
</compile_context>

<pallas_src>
import jax
import jax.numpy as jnp
from jax.experimental import pallas as pl
from jax.experimental.pallas import tpu as pltpu


def gen_initial_block_kernel(x_ref, w_ref, gb_ref, wrgb_ref, brgb_ref,
                             y_ref, rgb_ref):
    B = x_ref.shape[0]
    CS = w_ref.shape[1]             # hdim * 16  (flat NCHW feature width)
    hdim = gb_ref.shape[1]
    S = CS // hdim                  # 4*4 spatial positions per channel
    n = B * S                       # BN sample count per channel
    f32 = jnp.float32

    # ---- init_linear: x = [z | label | 1], w = [W^T ; b] (bias-as-matmul-row) ----
    # Weights arrive bf16 (halves the dominant HBM DMA); upcast in VMEM and keep the
    # matmul + accumulation in f32 (M=B=2 -> MXU pass count is irrelevant).
    lin = jnp.dot(x_ref[...], w_ref[...].astype(f32),
                  preferred_element_type=f32)                       # (B, CS) flat NCHW

    # ---- BatchNorm2d (training-mode batch stats, biased variance), one pass ----
    rsum = jnp.sum(lin, axis=0, keepdims=True)                      # (1, CS)
    rsum2 = jnp.sum(lin * lin, axis=0, keepdims=True)               # (1, CS)
    # Single lane-dense 0/1 mask: mask[c, j] = 1 iff lane j belongs to channel c.
    # S = 16 is a power of two -> one shift + one compare + one cast per element.
    shift_bits = S.bit_length() - 1
    rc = jax.lax.broadcasted_iota(jnp.int32, (hdim, CS), 0)
    cl = jax.lax.broadcasted_iota(jnp.int32, (hdim, CS), 1)
    if (1 << shift_bits) == S:
        mask = ((cl >> shift_bits) == rc).astype(f32)               # (hdim, CS)
    else:
        mask = ((cl // S) == rc).astype(f32)
    # Per-channel pooled sums: reuse the SAME mask with its lane axis contracted
    # (NT matmul, flash-attention-style dimension numbers) -> no second mask build.
    stats = jax.lax.dot_general(
        jnp.concatenate([rsum, rsum2], axis=0), mask,
        dimension_numbers=(((1,), (1,)), ((), ())),
        preferred_element_type=f32) * (1.0 / n)                     # (2, hdim)
    m = stats[0:1, :]
    var = jnp.maximum(stats[1:2, :] - m * m, 0.0)                   # cancellation guard
    scale = gb_ref[0:1, :] * jax.lax.rsqrt(var + 1e-5)              # (1, hdim)
    shift = gb_ref[1:2, :] - m * scale                              # (1, hdim)
    # Broadcast the per-channel affine back onto the flat lanes with the same mask (NN).
    affine = jnp.dot(jnp.concatenate([scale, shift], axis=0), mask,
                     preferred_element_type=f32)                    # (2, CS)

    hn = lin * affine[0:1, :] + affine[1:2, :]
    # ---- LeakyReLU(0.2) ----
    y = jnp.where(hn >= 0, hn, 0.2 * hn)                            # (B, CS)
    y_ref[...] = y                                                  # lane-dense store

    # ---- toRGB: 1x1 conv as one block-diagonal matmul (pre-kron'ed, bf16 in HBM) ----
    rgb_ref[...] = jnp.dot(y, wrgb_ref[...].astype(f32),
                           preferred_element_type=f32) + brgb_ref[...]   # (B, cdim*S)


def pack_gen_initial_block_params(params):
    """One-time parameter re-packing, hoisted out of the forward hot path."""
    w_lin = jnp.asarray(params["w_lin"], jnp.float32)    # (hdim*16, zfeat+class_num)
    b_lin = jnp.asarray(params["b_lin"], jnp.float32)    # (hdim*16,)
    gamma = jnp.asarray(params["gamma"], jnp.float32)    # (hdim,)
    beta = jnp.asarray(params["beta"], jnp.float32)      # (hdim,)
    w_rgb = jnp.asarray(params["w_rgb"], jnp.float32)    # (cdim, hdim, 1, 1)
    b_rgb = jnp.asarray(params["b_rgb"], jnp.float32)    # (cdim,)

    CS = w_lin.shape[0]
    hdim = gamma.shape[0]
    S = CS // hdim                                       # 16
    cdim = w_rgb.shape[0]

    # Linear weight transposed, bias folded in as an extra row (input gets a ones column).
    # Stored bf16: weight DMA is the dominant HBM traffic of the kernel.
    w_aug = jnp.concatenate([w_lin.T, b_lin.reshape(1, CS)],
                            axis=0).astype(jnp.bfloat16)             # (F+1, CS)
    gb = jnp.stack([gamma, beta], axis=0)                             # (2, hdim) f32
    # Block-diagonal toRGB weight so the 1x1 conv on flat NCHW is one MXU matmul.
    w_rgb_big = jnp.kron(w_rgb[:, :, 0, 0].T,
                         jnp.eye(S, dtype=jnp.float32)).astype(jnp.bfloat16)  # (CS, cdim*S)
    b_rgb_big = jnp.repeat(b_rgb, S).reshape(1, cdim * S).astype(jnp.float32)
    return {"w_aug": w_aug, "gb": gb, "w_rgb_big": w_rgb_big, "b_rgb_big": b_rgb_big,
            "hdim": hdim, "cdim": cdim, "S": S}


def gen_initial_block(z, label, packed, *, is_mnist=False):
    """Matches GenInitialBlock.forward(z, label) -> (y, rgb) in NCHW (is_mnist=False)."""
    if is_mnist:
        # TODO(synk): mnist_deconv (ConvTranspose2d 5x5, stride 2) branch not implemented
        # in the Pallas path; default module configuration is is_mnist=False.
        raise NotImplementedError("is_mnist=True path not implemented")

    B = z.shape[0]
    hdim, cdim, S = packed["hdim"], packed["cdim"], packed["S"]
    CS = hdim * S
    side = int(round(S ** 0.5))                                      # 4

    zf = jnp.reshape(z, (B, -1)).astype(jnp.float32)                 # z.view(B, -1)
    # [z | label | 1]: ones column pairs with the bias row folded into w_aug.
    x = jnp.concatenate([zf, jnp.asarray(label, jnp.float32),
                         jnp.ones((B, 1), jnp.float32)], axis=1)     # (B, F+1), tiny
    F = x.shape[1]

    vmem = pl.BlockSpec(memory_space=pltpu.MemorySpace.VMEM)
    flops = (2 * B * F * CS            # init_linear
             + 2 * 2 * CS * hdim       # BN stats pooling
             + 2 * 2 * hdim * CS       # BN affine broadcast
             + 2 * B * CS * (cdim * S))  # toRGB
    bytes_acc = (x.size * 4 + packed["w_aug"].size * 2 + packed["gb"].size * 4
                 + packed["w_rgb_big"].size * 2 + packed["b_rgb_big"].size * 4
                 + B * CS * 4 + B * cdim * S * 4)

    # Gridless single program: at B=2 the per-core work is trivial.
    # TODO(synk): at realistic batch sizes (B>=32) add grid=(pl.cdiv(B, TB),) over batch
    # with dimension_semantics=("parallel",) so both v7x TensorCores run.
    y_flat, rgb_flat = pl.pallas_call(
        gen_initial_block_kernel,
        out_shape=(jax.ShapeDtypeStruct((B, CS), jnp.float32),
                   jax.ShapeDtypeStruct((B, cdim * S), jnp.float32)),
        in_specs=[vmem] * 5,
        out_specs=(vmem, vmem),
        cost_estimate=pl.CostEstimate(flops=int(flops), transcendentals=int(hdim),
                                      bytes_accessed=int(bytes_acc)),
    )(x, packed["w_aug"], packed["gb"], packed["w_rgb_big"], packed["b_rgb_big"])

    # Flat-NCHW slabs -> (B, C, 4, 4): pure (free) reshape, no transpose needed.
    y = y_flat.reshape(B, hdim, side, side)
    rgb = rgb_flat.reshape(B, cdim, side, side)
    return y, rgb


# ---------------- pure-JAX reference (numerical sanity check) ----------------
def reference_forward(z, label, params):
    B = z.shape[0]
    zf = jnp.reshape(z, (B, -1))
    y = jnp.concatenate([zf, label], axis=1)
    lin = jnp.dot(y, params["w_lin"].T,
                  precision=jax.lax.Precision.HIGHEST) + params["b_lin"]
    hdim = params["gamma"].shape[0]
    h = lin.reshape(B, hdim, 4, 4)
    m = jnp.mean(h, axis=(0, 2, 3), keepdims=True)
    v = jnp.mean((h - m) ** 2, axis=(0, 2, 3), keepdims=True)
    gm = params["gamma"].reshape(1, hdim, 1, 1)
    bt = params["beta"].reshape(1, hdim, 1, 1)
    hn = (h - m) * jax.lax.rsqrt(v + 1e-5) * gm + bt
    yact = jnp.where(hn >= 0, hn, 0.2 * hn)
    rgb = jnp.einsum("bchw,oc->bohw", yact, params["w_rgb"][:, :, 0, 0],
                     precision=jax.lax.Precision.HIGHEST) \
        + params["b_rgb"].reshape(1, -1, 1, 1)
    return yact, rgb


if __name__ == "__main__":
    # Small shapes consistent with the module: hdim=64, class_num=10, cdim=3, batch=2.
    B, hdim, class_num, cdim = 2, 64, 10, 3
    CS = hdim * 16

    key = jax.random.PRNGKey(0)
    ks = jax.random.split(key, 8)
    # TODO(synk): the repo's external `weight_init` initializer is unavailable; weights
    # are initialized deterministically from PRNGKey(0) instead.
    params = {
        "w_lin": 0.1 * jax.random.normal(ks[0], (CS, hdim + class_num), jnp.float32),
        "b_lin": 0.1 * jax.random.normal(ks[1], (CS,), jnp.float32),
        "gamma": 1.0 + 0.02 * jax.random.normal(ks[2], (hdim,), jnp.float32),
        "beta": 0.02 * jax.random.normal(ks[3], (hdim,), jnp.float32),
        "w_rgb": 0.1 * jax.random.normal(ks[4], (cdim, hdim, 1, 1), jnp.float32),
        "b_rgb": 0.1 * jax.random.normal(ks[5], (cdim,), jnp.float32),
    }

    z = jax.random.normal(ks[6], (B, hdim, 1, 1), jnp.float32)
    label = jax.nn.one_hot(
        jax.random.randint(ks[7], (B,), 0, class_num), class_num
    ).astype(jnp.float32)

    # One-time packing (hoisted out of the per-call hot path).
    packed = jax.tree.map(jax.block_until_ready,
                          pack_gen_initial_block_params(params))

    y, rgb = gen_initial_block(z, label, packed)
    y = jax.block_until_ready(y)
    rgb = jax.block_until_ready(rgb)
    assert y.shape == (B, hdim, 4, 4)
    assert rgb.shape == (B, cdim, 4, 4)

    y_ref, rgb_ref = reference_forward(z, label, params)
    err_y = float(jnp.max(jnp.abs(y - y_ref)))
    err_rgb = float(jnp.max(jnp.abs(rgb - rgb_ref)))
    assert err_y < 2e-2, f"max abs err (y) vs reference = {err_y}"
    assert err_rgb < 2e-2, f"max abs err (rgb) vs reference = {err_rgb}"

    print("KERNEL_OK")
</pallas_src>

<mosaic_0001>
module attributes {stable_mosaic.version = 11 : i64} {
  func.func @gen_initial_block_kernel(%arg0: memref<2x75xf32, #tpu.memory_space<vmem>>, %arg1: memref<75x1024xbf16, #tpu.memory_space<vmem>>, %arg2: memref<2x64xf32, #tpu.memory_space<vmem>>, %arg3: memref<1024x48xbf16, #tpu.memory_space<vmem>>, %arg4: memref<1x48xf32, #tpu.memory_space<vmem>>, %arg5: memref<2x1024xf32, #tpu.memory_space<vmem>>, %arg6: memref<2x48xf32, #tpu.memory_space<vmem>>) attributes {dimension_semantics = [], scalar_prefetch = 0 : i64, scratch_operands = 0 : i64, tpu.core_type = #tpu.core_type<tc>} {
    %c0 = arith.constant 0 : index
    %c0_0 = arith.constant 0 : index
    %0 = vector.load %arg0[%c0, %c0_0] : memref<2x75xf32, #tpu.memory_space<vmem>>, vector<2x75xf32>
    %c0_1 = arith.constant 0 : index
    %c0_2 = arith.constant 0 : index
    %1 = vector.load %arg1[%c0_1, %c0_2] : memref<75x1024xbf16, #tpu.memory_space<vmem>>, vector<75x1024xbf16>
    %2 = arith.extf %1 : vector<75x1024xbf16> to vector<75x1024xf32>
    %cst = arith.constant dense<0.000000e+00> : vector<2x1024xf32>
    %3 = tpu.matmul %0, %2, %cst {dimension_numbers = #tpu.dot_dimension_numbers<[1], [0], [0], [1], [0, 0, 1, 1], [], []>} : vector<2x75xf32>, vector<75x1024xf32>, vector<2x1024xf32> -> vector<2x1024xf32>
    %cst_3 = arith.constant dense<0.000000e+00> : vector<1024xf32>
    %4 = vector.multi_reduction <add>, %3, %cst_3 [0] : vector<2x1024xf32> to vector<1024xf32>
    %5 = vector.shape_cast %4 : vector<1024xf32> to vector<1x1024xf32>
    %6 = arith.mulf %3, %3 : vector<2x1024xf32>
    %cst_4 = arith.constant dense<0.000000e+00> : vector<1024xf32>
    %7 = vector.multi_reduction <add>, %6, %cst_4 [0] : vector<2x1024xf32> to vector<1024xf32>
    %8 = vector.shape_cast %7 : vector<1024xf32> to vector<1x1024xf32>
    %9 = tpu.iota {dimensions = array<i32: 0>} : vector<64x1024xi32>
    %10 = tpu.iota {dimensions = array<i32: 1>} : vector<64x1024xi32>
    %c4_i32 = arith.constant 4 : i32
    %11 = vector.broadcast %c4_i32 : i32 to vector<64x1024xi32>
    %12 = arith.shrsi %10, %11 : vector<64x1024xi32>
    %13 = arith.cmpi eq, %12, %9 : vector<64x1024xi32>
    %14 = arith.extui %13 : vector<64x1024xi1> to vector<64x1024xi32>
    %15 = arith.sitofp %14 : vector<64x1024xi32> to vector<64x1024xf32>
    %16 = tpu.concatenate %5, %8 in 0 : vector<1x1024xf32>, vector<1x1024xf32> -> vector<2x1024xf32>
    %cst_5 = arith.constant dense<0.000000e+00> : vector<2x64xf32>
    %17 = tpu.matmul %16, %15, %cst_5 {dimension_numbers = #tpu.dot_dimension_numbers<[1], [1], [0], [0], [0, 0, 1, 0], [], []>} : vector<2x1024xf32>, vector<64x1024xf32>, vector<2x64xf32> -> vector<2x64xf32>
    %cst_6 = arith.constant 3.125000e-02 : f32
    %18 = vector.broadcast %cst_6 : f32 to vector<2x64xf32>
    %19 = arith.mulf %17, %18 : vector<2x64xf32>
    %20 = vector.extract_strided_slice %19 {offsets = [0, 0], sizes = [1, 64], strides = [1, 1]} : vector<2x64xf32> to vector<1x64xf32>
    %21 = vector.extract_strided_slice %19 {offsets = [1, 0], sizes = [1, 64], strides = [1, 1]} : vector<2x64xf32> to vector<1x64xf32>
    %22 = arith.mulf %20, %20 : vector<1x64xf32>
    %23 = arith.subf %21, %22 : vector<1x64xf32>
    %cst_7 = arith.constant 0.000000e+00 : f32
    %24 = vector.broadcast %cst_7 : f32 to vector<1x64xf32>
    %25 = arith.maximumf %23, %24 : vector<1x64xf32>
    %c0_8 = arith.constant 0 : index
    %c0_9 = arith.constant 0 : index
    %26 = vector.load %arg2[%c0_8, %c0_9] : memref<2x64xf32, #tpu.memory_space<vmem>>, vector<1x64xf32>
    %cst_10 = arith.constant 9.99999974E-6 : f32
    %27 = vector.broadcast %cst_10 : f32 to vector<1x64xf32>
    %28 = arith.addf %25, %27 : vector<1x64xf32>
    %29 = math.rsqrt %28 : vector<1x64xf32>
    %30 = arith.mulf %26, %29 : vector<1x64xf32>
    %c1 = arith.constant 1 : index
    %c0_11 = arith.constant 0 : index
    %31 = vector.load %arg2[%c1, %c0_11] : memref<2x64xf32, #tpu.memory_space<vmem>>, vector<1x64xf32>
    %32 = arith.mulf %20, %30 : vector<1x64xf32>
    %33 = arith.subf %31, %32 : vector<1x64xf32>
    %34 = tpu.concatenate %30, %33 in 0 : vector<1x64xf32>, vector<1x64xf32> -> vector<2x64xf32>
    %cst_12 = arith.constant dense<0.000000e+00> : vector<2x1024xf32>
    %35 = tpu.matmul %34, %15, %cst_12 {dimension_numbers = #tpu.dot_dimension_numbers<[1], [0], [0], [1], [0, 0, 1, 1], [], []>} : vector<2x64xf32>, vector<64x1024xf32>, vector<2x1024xf32> -> vector<2x1024xf32>
    %36 = vector.extract_strided_slice %35 {offsets = [0, 0], sizes = [1, 1024], strides = [1, 1]} : vector<2x1024xf32> to vector<1x1024xf32>
    %37 = vector.broadcast %36 : vector<1x1024xf32> to vector<2x1024xf32>
    %38 = arith.mulf %3, %37 : vector<2x1024xf32>
    %39 = vector.extract_strided_slice %35 {offsets = [1, 0], sizes = [1, 1024], strides = [1, 1]} : vector<2x1024xf32> to vector<1x1024xf32>
    %40 = vector.broadcast %39 : vector<1x1024xf32> to vector<2x1024xf32>
    %41 = arith.addf %38, %40 : vector<2x1024xf32>
    %cst_13 = arith.constant 0.000000e+00 : f32
    %42 = vector.broadcast %cst_13 : f32 to vector<2x1024xf32>
    %43 = arith.cmpf oge, %41, %42 : vector<2x1024xf32>
    %cst_14 = arith.constant 2.000000e-01 : f32
    %44 = vector.broadcast %cst_14 : f32 to vector<2x1024xf32>
    %45 = arith.mulf %44, %41 : vector<2x1024xf32>
    %46 = arith.select %43, %41, %45 : vector<2x1024xi1>, vector<2x1024xf32>
    %c0_15 = arith.constant 0 : index
    %c0_16 = arith.constant 0 : index
    %47 = vector.load %arg5[%c0_15, %c0_16] : memref<2x1024xf32, #tpu.memory_space<vmem>>, vector<2x1024xf32>
    tpu.vector_store %arg5[%c0_15, %c0_16], %46 {strides = array<i32>} : memref<2x1024xf32, #tpu.memory_space<vmem>>, vector<2x1024xf32>,
    %c0_17 = arith.constant 0 : index
    %c0_18 = arith.constant 0 : index
    %48 = vector.load %arg3[%c0_17, %c0_18] : memref<1024x48xbf16, #tpu.memory_space<vmem>>, vector<1024x48xbf16>
    %49 = arith.extf %48 : vector<1024x48xbf16> to vector<1024x48xf32>
    %cst_19 = arith.constant dense<0.000000e+00> : vector<2x48xf32>
    %50 = tpu.matmul %46, %49, %cst_19 {dimension_numbers = #tpu.dot_dimension_numbers<[1], [0], [0], [1], [0, 0, 1, 1], [], []>} : vector<2x1024xf32>, vector<1024x48xf32>, vector<2x48xf32> -> vector<2x48xf32>
    %c0_20 = arith.constant 0 : index
    %c0_21 = arith.constant 0 : index
    %51 = vector.load %arg4[%c0_20, %c0_21] : memref<1x48xf32, #tpu.memory_space<vmem>>, vector<1x48xf32>
    %52 = vector.broadcast %51 : vector<1x48xf32> to vector<2x48xf32>
    %53 = arith.addf %50, %52 : vector<2x48xf32>
    %c0_22 = arith.constant 0 : index
    %c0_23 = arith.constant 0 : index
    %54 = vector.load %arg6[%c0_22, %c0_23] : memref<2x48xf32, #tpu.memory_space<vmem>>, vector<2x48xf32>
    tpu.vector_store %arg6[%c0_22, %c0_23], %53 {strides = array<i32>} : memref<2x48xf32, #tpu.memory_space<vmem>>, vector<2x48xf32>,
    return
  }
}

</mosaic_0001>

<llo_original>
// kernel: tpu_custom_call.1
$region0: #{tpu_custom_call.1}
  #allocation0 [shape = 'u32[]', space=smem, size = 0x4, offset = 0x4, fixed_abs, tag = 'smem constant byte address 0x4 - core index']
  #allocation1 [shape = 'u32[144,128]{1,0:T(1,128)}', space=vmem, size = 0x12000, scoped, tag = 'internal scratch']
  %s0 = inlined_call_operand.vmem [shape: f32[2,75], index: 0, kind: input, shape index: {}]
  %s1 = inlined_call_operand.vmem [shape: bf16[75,1024], index: 1, kind: input, shape index: {}]
  %s2 = inlined_call_operand.vmem [shape: f32[2,64], index: 2, kind: input, shape index: {}]
  %s3 = inlined_call_operand.vmem [shape: bf16[1024,48], index: 3, kind: input, shape index: {}]
  %s4 = inlined_call_operand.vmem [shape: f32[1,48], index: 4, kind: input, shape index: {}]
  %s5 = inlined_call_operand.hbm [shape: f32[2,1024], index: 5, kind: output, shape index: {0}]
  %s6 = inlined_call_operand.hbm [shape: f32[2,48], index: 6, kind: output, shape index: {1}]
  %7 = xla_tuple %s5, %s6
  %s8 = sld [smem:[#allocation0]]
  $region38: #{tpu_custom_call.1} parent=0
    _
  %s10 = ssub.s32 1, %s8
  %s11 = scalar_select 0, %s10, %s8
  $region1: #{tpu_custom_call.1} parent=0
    #allocation2 [shape = 'u8[8192]{0}', space=vmem, size = 0x2000, scoped, tag = 'output window, operand 0, single buffered']
    #allocation3 [shape = 's32[1]{0}', space=sflag, size = 0x4, scoped, tag = 'scoped memory for tpu_custom_call.1']
    #allocation4 [shape = 'u8[1024]{0}', space=vmem, size = 0x400, scoped, tag = 'output window, operand 1, single buffered']
    #allocation5 [shape = 's32[1]{0}', space=sflag, size = 0x4, scoped, tag = 'scoped memory for tpu_custom_call.1']
    %12 = vsyncpa [#allocation3], 0
    %13 = vsyncpa [#allocation5], 0
    // Predicated region
    $region2: #{tpu_custom_call.1} parent=1 // pred_check
      _
    $region3: #{tpu_custom_call.1} parent=1 // pred_check_branch
      %15 = sbr.rel (0) target = $region5
    $region4: #{tpu_custom_call.1} parent=1 // pred_region
      _
    $region5: #{tpu_custom_call.1} parent=1 // pred_fallthru
      _
    // Predicated region
    $region6: #{tpu_custom_call.1} parent=1 // pred_check
      _
    $region7: #{tpu_custom_call.1} parent=1 // pred_check_branch
      %17 = sbr.rel (0) target = $region9
    $region8: #{tpu_custom_call.1} parent=1 // pred_region
      _
    $region9: #{tpu_custom_call.1} parent=1 // pred_fallthru
      _
    // Predicated region
    $region10: #{tpu_custom_call.1} parent=1 // pred_check
      _
    $region11: #{tpu_custom_call.1} parent=1 // pred_check_branch
      %19 = sbr.rel (0) target = $region13
    $region12: #{tpu_custom_call.1} parent=1 // pred_region
      _
    $region13: #{tpu_custom_call.1} parent=1 // pred_fallthru
      _
    // Predicated region
    $region14: #{tpu_custom_call.1} parent=1 // pred_check
      _
    $region15: #{tpu_custom_call.1} parent=1 // pred_check_branch
      %21 = sbr.rel (0) target = $region17
    $region16: #{tpu_custom_call.1} parent=1 // pred_region
      _
    $region17: #{tpu_custom_call.1} parent=1 // pred_fallthru
      _
    // Predicated region
    $region18: #{tpu_custom_call.1} parent=1 // pred_check
      _
    $region19: #{tpu_custom_call.1} parent=1 // pred_check_branch
      %23 = sbr.rel (0) target = $region21
    $region20: #{tpu_custom_call.1} parent=1 // pred_region
      _
    $region21: #{tpu_custom_call.1} parent=1 // pred_fallthru
      _
    %v24 = vld [vmem:[%s0] sm:$0x3]
    %v25 = vld [vmem:[%s1] sm:$0xff]
    %v26 = vld [vmem:[%s1 + $0x8] sm:$0xff]
    %v27 = vld [vmem:[%s1 + $0x10] sm:$0xff]
    %v28 = vld [vmem:[%s1 + $0x18] sm:$0xff]
    %v29 = vld [vmem:[%s1 + $0x20] sm:$0xff]
    %v30 = vld [vmem:[%s1 + $0x28] sm:$0xff]
    %v31 = vld [vmem:[%s1 + $0x30] sm:$0xff]
    %v32 = vld [vmem:[%s1 + $0x38] sm:$0xff]
    %v33 = vld [vmem:[%s1 + $0x40] sm:$0xff]
    %v34 = vld [vmem:[%s1 + $0x48] sm:$0xff]
    %v35 = vld [vmem:[%s1 + $0x50] sm:$0xff]
    %v36 = vld [vmem:[%s1 + $0x58] sm:$0xff]
    %v37 = vld [vmem:[%s1 + $0x60] sm:$0xff]
    %v38 = vld [vmem:[%s1 + $0x68] sm:$0xff]
    %v39 = vld [vmem:[%s1 + $0x70] sm:$0xff]
    %v40 = vld [vmem:[%s1 + $0x78] sm:$0xff]
    %v41 = vld [vmem:[%s1 + $0x80] sm:$0xff]
    %v42 = vld [vmem:[%s1 + $0x88] sm:$0xff]
    %v43 = vld [vmem:[%s1 + $0x90] sm:$0xff]
    %v44 = vld [vmem:[%s1 + $0x98] sm:$0xff]
    %v45 = vld [vmem:[%s1 + $0xa0] sm:$0xff]
    %v46 = vld [vmem:[%s1 + $0xa8] sm:$0xff]
    %v47 = vld [vmem:[%s1 + $0xb0] sm:$0xff]
    %v48 = vld [vmem:[%s1 + $0xb8] sm:$0xff]
    %v49 = vld [vmem:[%s1 + $0xc0] sm:$0xff]
    %v50 = vld [vmem:[%s1 + $0xc8] sm:$0xff]
    %v51 = vld [vmem:[%s1 + $0xd0] sm:$0xff]
    %v52 = vld [vmem:[%s1 + $0xd8] sm:$0xff]
    %v53 = vld [vmem:[%s1 + $0xe0] sm:$0xff]
    %v54 = vld [vmem:[%s1 + $0xe8] sm:$0xff]
    %v55 = vld [vmem:[%s1 + $0xf0] sm:$0xff]
    %v56 = vld [vmem:[%s1 + $0xf8] sm:$0xff]
    %v57 = vld [vmem:[%s1 + $0x100] sm:$0xff]
    %v58 = vld [vmem:[%s1 + $0x108] sm:$0xff]
    %v59 = vld [vmem:[%s1 + $0x110] sm:$0xff]
    %v60 = vld [vmem:[%s1 + $0x118] sm:$0xff]
    %v61 = vld [vmem:[%s1 + $0x120] sm:$0x33]
    %v62 = vld [vmem:[%s1 + $0x128] sm:$0x33]
    %v63 = vld [vmem:[%s1 + $0x130] sm:$0x33]
    %v64 = vld [vmem:[%s1 + $0x138] sm:$0x33]
    %v65 = vunpack.c.l.bf16 %v25
    %v66 = vunpack.c.h.bf16 %v25
    %v67 = vunpack.c.l.bf16 %v26
    %v68 = vunpack.c.h.bf16 %v26
    %v69 = vunpack.c.l.bf16 %v27
    %v70 = vunpack.c.h.bf16 %v27
    %v71 = vunpack.c.l.bf16 %v28
    %v72 = vunpack.c.h.bf16 %v28
    %v73 = vunpack.c.l.bf16 %v29
    %v74 = vunpack.c.h.bf16 %v29
    %v75 = vunpack.c.l.bf16 %v30
    %v76 = vunpack.c.h.bf16 %v30
    %v77 = vunpack.c.l.bf16 %v31
    %v78 = vunpack.c.h.bf16 %v31
    %v79 = vunpack.c.l.bf16 %v32
    %v80 = vunpack.c.h.bf16 %v32
    %v81 = vunpack.c.l.bf16 %v33
    %v82 = vunpack.c.h.bf16 %v33
    %v83 = vunpack.c.l.bf16 %v34
    %v84 = vunpack.c.h.bf16 %v34
    %v85 = vunpack.c.l.bf16 %v35
    %v86 = vunpack.c.h.bf16 %v35
    %v87 = vunpack.c.l.bf16 %v36
    %v88 = vunpack.c.h.bf16 %v36
    %v89 = vunpack.c.l.bf16 %v37
    %v90 = vunpack.c.h.bf16 %v37
    %v91 = vunpack.c.l.bf16 %v38
    %v92 = vunpack.c.h.bf16 %v38
    %v93 = vunpack.c.l.bf16 %v39
    %v94 = vunpack.c.h.bf16 %v39
    %v95 = vunpack.c.l.bf16 %v40
    %v96 = vunpack.c.h.bf16 %v40
    %v97 = vunpack.c.l.bf16 %v41
    %v98 = vunpack.c.h.bf16 %v41
    %v99 = vunpack.c.l.bf16 %v42
    %v100 = vunpack.c.h.bf16 %v42
    %v101 = vunpack.c.l.bf16 %v43
    %v102 = vunpack.c.h.bf16 %v43
    %v103 = vunpack.c.l.bf16 %v44
    %v104 = vunpack.c.h.bf16 %v44
    %v105 = vunpack.c.l.bf16 %v45
    %v106 = vunpack.c.h.bf16 %v45
    %v107 = vunpack.c.l.bf16 %v46
    %v108 = vunpack.c.h.bf16 %v46
    %v109 = vunpack.c.l.bf16 %v47
    %v110 = vunpack.c.h.bf16 %v47
    %v111 = vunpack.c.l.bf16 %v48
    %v112 = vunpack.c.h.bf16 %v48
    %v113 = vunpack.c.l.bf16 %v49
    %v114 = vunpack.c.h.bf16 %v49
    %v115 = vunpack.c.l.bf16 %v50
    %v116 = vunpack.c.h.bf16 %v50
    %v117 = vunpack.c.l.bf16 %v51
    %v118 = vunpack.c.h.bf16 %v51
    %v119 = vunpack.c.l.bf16 %v52
    %v120 = vunpack.c.h.bf16 %v52
    %v121 = vunpack.c.l.bf16 %v53
    %v122 = vunpack.c.h.bf16 %v53
    %v123 = vunpack.c.l.bf16 %v54
    %v124 = vunpack.c.h.bf16 %v54
    %v125 = vunpack.c.l.bf16 %v55
    %v126 = vunpack.c.h.bf16 %v55
    %v127 = vunpack.c.l.bf16 %v56
    %v128 = vunpack.c.h.bf16 %v56
    %v129 = vunpack.c.l.bf16 %v57
    %v130 = vunpack.c.h.bf16 %v57
    %v131 = vunpack.c.l.bf16 %v58
    %v132 = vunpack.c.h.bf16 %v58
    %v133 = vunpack.c.l.bf16 %v59
    %v134 = vunpack.c.h.bf16 %v59
    %v135 = vunpack.c.l.bf16 %v60
    %v136 = vunpack.c.h.bf16 %v60
    %v137 = vunpack.c.l.bf16 %v61
    %v138 = vunpack.c.h.bf16 %v61
    %v139 = vunpack.c.l.bf16 %v62
    %v140 = vunpack.c.h.bf16 %v62
    %v141 = vunpack.c.l.bf16 %v63
    %v142 = vunpack.c.h.bf16 %v63
    %v143 = vunpack.c.l.bf16 %v64
    %v144 = vunpack.c.h.bf16 %v64
    %vm145 = vcmask 613376
    %v147 = vsel %vm145, %v24, 0
    %vm149 = vcmask 1042432
    %v151 = vsel %vm149, %v137, 0
    %v154 = vsel %vm149, %v138, 0
    %v157 = vsel %vm149, %v139, 0
    %v160 = vsel %vm149, %v140, 0
    %v163 = vsel %vm149, %v141, 0
    %v166 = vsel %vm149, %v142, 0
    %v169 = vsel %vm149, %v143, 0
    %v172 = vsel %vm149, %v144, 0
    %174 = vmatprep.subr.mxu0 %v66
    %175 = vmatpush1.msra.mxu0 %v65
    %176 = vmatprep.subr.mxu0 %v74
    %177 = vmatpush1.msra.mxu0 %v73
    %178 = vmatprep.subr.mxu0 %v82
    %179 = vmatpush1.msra.mxu0 %v81
    %180 = vmatprep.subr.mxu0 %v90
    %181 = vmatpush1.msra.mxu0 %v89
    %182 = vmatprep.subr.mxu0 %v98
    %183 = vmatpush1.msra.mxu0 %v97
    %184 = vmatprep.subr.mxu0 %v106
    %185 = vmatpush1.msra.mxu0 %v105
    %186 = vmatprep.subr.mxu0 %v114
    %187 = vmatpush1.msra.mxu0 %v113
    %188 = vmatprep.subr.mxu0 %v122
    %189 = vmatpush1.msra.mxu0 %v121
    %190 = vmatprep.subr.mxu0 %v130
    %191 = vmatpush1.msra.mxu0 %v129
    %192 = vmatprep.subr.mxu0 %v154
    %193 = vmatpush1.msra.mxu0 %v151
    %194 = vmatprep.subr.mxu0 0.0
    %195 = vmatpush1.msra.mxu0 0.0
    %196 = vmatprep.subr.mxu0 0.0
    %197 = vmatpush1.msra.mxu0 0.0
    %198 = vmatprep.subr.mxu0 0.0
    %199 = vmatpush1.msra.mxu0 0.0
    %200 = vmatprep.subr.mxu0 0.0
    %201 = vmatpush1.msra.mxu0 0.0
    %202 = vmatprep.subr.mxu0 0.0
    %203 = vmatpush1.msra.mxu0 0.0
    %204 = vmatprep.subr.mxu0 0.0
    %205 = vmatpush1.msra.mxu0 0.0
    %206 = vmatprep.subr.mxu0 0.0
    %207 = vmatpush1.msra.mxu0 0.0
    %208 = vmatprep.subr.mxu0 0.0
    %209 = vmatpush1.msra.mxu0 0.0
    %210 = vmatprep.subr.mxu0 0.0
    %211 = vmatpush1.msra.mxu0 0.0
    %212 = vmatprep.subr.mxu0 0.0
    %213 = vmatpush1.msra.mxu0 0.0
    %214 = vmatprep.subr.mxu0 0.0
    %215 = vmatpush1.msra.mxu0 0.0
    %216 = vmatprep.subr.mxu0 0.0
    %217 = vmatpush1.msra.mxu0 0.0
    %218 = vmatprep.subr.mxu0 0.0
    %219 = vmatpush1.msra.mxu0 0.0
    %220 = vmatprep.subr.mxu0 0.0
    %221 = vmatpush1.msra.mxu0 0.0
    %222 = vmatprep.subr.mxu0 0.0
    %223 = vmatpush1.msra.mxu0 0.0
    %224 = vmatprep.subr.mxu0 0.0
    %225 = vmatpush1.msra.mxu0 0.0
    %226 = vmatprep.subr.mxu0 0.0
    %227 = vmatpush1.msra.mxu0 0.0
    %228 = vmatprep.subr.mxu0 0.0
    %229 = vmatpush1.msra.mxu0 0.0
    %230 = vmatprep.subr.mxu0 0.0
    %231 = vmatpush1.msra.mxu0 0.0
    %232 = vmatprep.subr.mxu0 0.0
    %233 = vmatpush1.msra.mxu0 0.0
    %234 = vmatprep.subr.mxu0 0.0
    %235 = vmatpush1.msra.mxu0 0.0
    %236 = vmatprep.subr.mxu0 0.0
    %237 = vmatpush1.msra.mxu0 0.0
    %238 = vmatprep.mubr.f32.mxu0 0.0
    %239 = vmatmul.mubr.f32.gmra.mrb[0].mxu0 %v147
    %v240 = vpop.f32.mrb[0].mxu0
    %v241 = vadd.f32 0.0, %v240
    %v242 = vpop.f32.mrb[0].mxu0
    %v243 = vadd.f32 0.0, %v242
    %244 = vdwg.mxu0
    %245 = vmatprep.subr.mxu0 %v68
    %246 = vmatpush1.msra.mxu0 %v67
    %247 = vmatprep.subr.mxu0 %v76
    %248 = vmatpush1.msra.mxu0 %v75
    %249 = vmatprep.subr.mxu0 %v84
    %250 = vmatpush1.msra.mxu0 %v83
    %251 = vmatprep.subr.mxu0 %v92
    %252 = vmatpush1.msra.mxu0 %v91
    %253 = vmatprep.subr.mxu0 %v100
    %254 = vmatpush1.msra.mxu0 %v99
    %255 = vmatprep.subr.mxu0 %v108
    %256 = vmatpush1.msra.mxu0 %v107
    %257 = vmatprep.subr.mxu0 %v116
    %258 = vmatpush1.msra.mxu0 %v115
    %259 = vmatprep.subr.mxu0 %v124
    %260 = vmatpush1.msra.mxu0 %v123
    %261 = vmatprep.subr.mxu0 %v132
    %262 = vmatpush1.msra.mxu0 %v131
    %263 = vmatprep.subr.mxu0 %v160
    %264 = vmatpush1.msra.mxu0 %v157
    %265 = vmatprep.subr.mxu0 0.0
    %266 = vmatpush1.msra.mxu0 0.0
    %267 = vmatprep.subr.mxu0 0.0
    %268 = vmatpush1.msra.mxu0 0.0
    %269 = vmatprep.subr.mxu0 0.0
    %270 = vmatpush1.msra.mxu0 0.0
    %271 = vmatprep.subr.mxu0 0.0
    %272 = vmatpush1.msra.mxu0 0.0
    %273 = vmatprep.subr.mxu0 0.0
    %274 = vmatpush1.msra.mxu0 0.0
    %275 = vmatprep.subr.mxu0 0.0
    %276 = vmatpush1.msra.mxu0 0.0
    %277 = vmatprep.subr.mxu0 0.0
    %278 = vmatpush1.msra.mxu0 0.0
    %279 = vmatprep.subr.mxu0 0.0
    %280 = vmatpush1.msra.mxu0 0.0
    %281 = vmatprep.subr.mxu0 0.0
    %282 = vmatpush1.msra.mxu0 0.0
    %283 = vmatprep.subr.mxu0 0.0
    %284 = vmatpush1.msra.mxu0 0.0
    %285 = vmatprep.subr.mxu0 0.0
    %286 = vmatpush1.msra.mxu0 0.0
    %287 = vmatprep.subr.mxu0 0.0
    %288 = vmatpush1.msra.mxu0 0.0
    %289 = vmatprep.subr.mxu0 0.0
    %290 = vmatpush1.msra.mxu0 0.0
    %291 = vmatprep.subr.mxu0 0.0
    %292 = vmatpush1.msra.mxu0 0.0
    %293 = vmatprep.subr.mxu0 0.0
    %294 = vmatpush1.msra.mxu0 0.0
    %295 = vmatprep.subr.mxu0 0.0
    %296 = vmatpush1.msra.mxu0 0.0
    %297 = vmatprep.subr.mxu0 0.0
    %298 = vmatpush1.msra.mxu0 0.0
    %299 = vmatprep.subr.mxu0 0.0
    %300 = vmatpush1.msra.mxu0 0.0
    %301 = vmatprep.subr.mxu0 0.0
    %302 = vmatpush1.msra.mxu0 0.0
    %303 = vmatprep.subr.mxu0 0.0
    %304 = vmatpush1.msra.mxu0 0.0
    %305 = vmatprep.subr.mxu0 0.0
    %306 = vmatpush1.msra.mxu0 0.0
    %307 = vmatprep.subr.mxu0 0.0
    %308 = vmatpush1.msra.mxu0 0.0
    %309 = vmatprep.mubr.f32.mxu0 0.0
    %310 = vmatmul.mubr.f32.gmra.mrb[0].mxu0 %v147
    %v311 = vpop.f32.mrb[0].mxu0
    %v312 = vadd.f32 0.0, %v311
    %v313 = vpop.f32.mrb[0].mxu0
    %v314 = vadd.f32 0.0, %v313
    %315 = vdwg.mxu0
    %316 = vmatprep.subr.mxu0 %v70
    %317 = vmatpush1.msra.mxu0 %v69
    %318 = vmatprep.subr.mxu0 %v78
    %319 = vmatpush1.msra.mxu0 %v77
    %320 = vmatprep.subr.mxu0 %v86
    %321 = vmatpush1.msra.mxu0 %v85
    %322 = vmatprep.subr.mxu0 %v94
    %323 = vmatpush1.msra.mxu0 %v93
    %324 = vmatprep.subr.mxu0 %v102
    %325 = vmatpush1.msra.mxu0 %v101
    %326 = vmatprep.subr.mxu0 %v110
    %327 = vmatpush1.msra.mxu0 %v109
    %328 = vmatprep.subr.mxu0 %v118
    %329 = vmatpush1.msra.mxu0 %v117
    %330 = vmatprep.subr.mxu0 %v126
    %331 = vmatpush1.msra.mxu0 %v125
    %332 = vmatprep.subr.mxu0 %v134
    %333 = vmatpush1.msra.mxu0 %v133
    %334 = vmatprep.subr.mxu0 %v166
    %335 = vmatpush1.msra.mxu0 %v163
    %336 = vmatprep.subr.mxu0 0.0
    %337 = vmatpush1.msra.mxu0 0.0
    %338 = vmatprep.subr.mxu0 0.0
    %339 = vmatpush1.msra.mxu0 0.0
    %340 = vmatprep.subr.mxu0 0.0
    %341 = vmatpush1.msra.mxu0 0.0
    %342 = vmatprep.subr.mxu0 0.0
    %343 = vmatpush1.msra.mxu0 0.0
    %344 = vmatprep.subr.mxu0 0.0
    %345 = vmatpush1.msra.mxu0 0.0
    %346 = vmatprep.subr.mxu0 0.0
    %347 = vmatpush1.msra.mxu0 0.0
    %348 = vmatprep.subr.mxu0 0.0
    %349 = vmatpush1.msra.mxu0 0.0
    %350 = vmatprep.subr.mxu0 0.0
    %351 = vmatpush1.msra.mxu0 0.0
    %352 = vmatprep.subr.mxu0 0.0
    %353 = vmatpush1.msra.mxu0 0.0
    %354 = vmatprep.subr.mxu0 0.0
    %355 = vmatpush1.msra.mxu0 0.0
    %356 = vmatprep.subr.mxu0 0.0
    %357 = vmatpush1.msra.mxu0 0.0
    %358 = vmatprep.subr.mxu0 0.0
    %359 = vmatpush1.msra.mxu0 0.0
    %360 = vmatprep.subr.mxu0 0.0
    %361 = vmatpush1.msra.mxu0 0.0
    %362 = vmatprep.subr.mxu0 0.0
    %363 = vmatpush1.msra.mxu0 0.0
    %364 = vmatprep.subr.mxu0 0.0
    %365 = vmatpush1.msra.mxu0 0.0
    %366 = vmatprep.subr.mxu0 0.0
    %367 = vmatpush1.msra.mxu0 0.0
    %368 = vmatprep.subr.mxu0 0.0
    %369 = vmatpush1.msra.mxu0 0.0
    %370 = vmatprep.subr.mxu0 0.0
    %371 = vmatpush1.msra.mxu0 0.0
    %372 = vmatprep.subr.mxu0 0.0
    %373 = vmatpush1.msra.mxu0 0.0
    %374 = vmatprep.subr.mxu0 0.0
    %375 = vmatpush1.msra.mxu0 0.0
    %376 = vmatprep.subr.mxu0 0.0
    %377 = vmatpush1.msra.mxu0 0.0
    %378 = vmatprep.subr.mxu0 0.0
    %379 = vmatpush1.msra.mxu0 0.0
    %380 = vmatprep.mubr.f32.mxu0 0.0
    %381 = vmatmul.mubr.f32.gmra.mrb[0].mxu0 %v147
    %v382 = vpop.f32.mrb[0].mxu0
    %v383 = vadd.f32 0.0, %v382
    %v384 = vpop.f32.mrb[0].mxu0
    %v385 = vadd.f32 0.0, %v384
    %386 = vdwg.mxu0
    %387 = vmatprep.subr.mxu0 %v72
    %388 = vmatpush1.msra.mxu0 %v71
    %389 = vmatprep.subr.mxu0 %v80
    %390 = vmatpush1.msra.mxu0 %v79
    %391 = vmatprep.subr.mxu0 %v88
    %392 = vmatpush1.msra.mxu0 %v87
    %393 = vmatprep.subr.mxu0 %v96
    %394 = vmatpush1.msra.mxu0 %v95
    %395 = vmatprep.subr.mxu0 %v104
    %396 = vmatpush1.msra.mxu0 %v103
    %397 = vmatprep.subr.mxu0 %v112
    %398 = vmatpush1.msra.mxu0 %v111
    %399 = vmatprep.subr.mxu0 %v120
    %400 = vmatpush1.msra.mxu0 %v119
    %401 = vmatprep.subr.mxu0 %v128
    %402 = vmatpush1.msra.mxu0 %v127
    %403 = vmatprep.subr.mxu0 %v136
    %404 = vmatpush1.msra.mxu0 %v135
    %405 = vmatprep.subr.mxu0 %v172
    %406 = vmatpush1.msra.mxu0 %v169
    %407 = vmatprep.subr.mxu0 0.0
    %408 = vmatpush1.msra.mxu0 0.0
    %409 = vmatprep.subr.mxu0 0.0
    %410 = vmatpush1.msra.mxu0 0.0
    %411 = vmatprep.subr.mxu0 0.0
    %412 = vmatpush1.msra.mxu0 0.0
    %413 = vmatprep.subr.mxu0 0.0
    %414 = vmatpush1.msra.mxu0 0.0
    %415 = vmatprep.subr.mxu0 0.0
    %416 = vmatpush1.msra.mxu0 0.0
    %417 = vmatprep.subr.mxu0 0.0
    %418 = vmatpush1.msra.mxu0 0.0
    %419 = vmatprep.subr.mxu0 0.0
    %420 = vmatpush1.msra.mxu0 0.0
    %421 = vmatprep.subr.mxu0 0.0
    %422 = vmatpush1.msra.mxu0 0.0
    %423 = vmatprep.subr.mxu0 0.0
    %424 = vmatpush1.msra.mxu0 0.0
    %425 = vmatprep.subr.mxu0 0.0
    %426 = vmatpush1.msra.mxu0 0.0
    %427 = vmatprep.subr.mxu0 0.0
    %428 = vmatpush1.msra.mxu0 0.0
    %429 = vmatprep.subr.mxu0 0.0
    %430 = vmatpush1.msra.mxu0 0.0
    %431 = vmatprep.subr.mxu0 0.0
    %432 = vmatpush1.msra.mxu0 0.0
    %433 = vmatprep.subr.mxu0 0.0
    %434 = vmatpush1.msra.mxu0 0.0
    %435 = vmatprep.subr.mxu0 0.0
    %436 = vmatpush1.msra.mxu0 0.0
    %437 = vmatprep.subr.mxu0 0.0
    %438 = vmatpush1.msra.mxu0 0.0
    %439 = vmatprep.subr.mxu0 0.0
    %440 = vmatpush1.msra.mxu0 0.0
    %441 = vmatprep.subr.mxu0 0.0
    %442 = vmatpush1.msra.mxu0 0.0
    %443 = vmatprep.subr.mxu0 0.0
    %444 = vmatpush1.msra.mxu0 0.0
    %445 = vmatprep.subr.mxu0 0.0
    %446 = vmatpush1.msra.mxu0 0.0
    %447 = vmatprep.subr.mxu0 0.0
    %448 = vmatpush1.msra.mxu0 0.0
    %449 = vmatprep.subr.mxu0 0.0
    %450 = vmatpush1.msra.mxu0 0.0
    %451 = vmatprep.mubr.f32.mxu0 0.0
    %452 = vmatmul.mubr.f32.gmra.mrb[0].mxu0 %v147
    %v453 = vpop.f32.mrb[0].mxu0
    %v454 = vadd.f32 0.0, %v453
    %v455 = vpop.f32.mrb[0].mxu0
    %v456 = vadd.f32 0.0, %v455
    %457 = vdwg.mxu0
    %vm458 = vcmask 1041408
    %v459 = vsel %vm458, %v241, 0.0
    %v460 = vrot.slane %v459, 4
    %v461 = vadd.f32 %v459, %v460
    %v462 = vrot.slane %v461, 2
    %v463 = vadd.f32 %v461, %v462
    %v464 = vrot.slane %v463, 1
    %v465 = vadd.f32 %v463, %v464
    %v466 = vsel %vm458, %v243, 0.0
    %v467 = vrot.slane %v466, 4
    %v468 = vadd.f32 %v466, %v467
    %v469 = vrot.slane %v468, 2
    %v470 = vadd.f32 %v468, %v469
    %v471 = vrot.slane %v470, 1
    %v472 = vadd.f32 %v470, %v471
    %v473 = vsel %vm458, %v312, 0.0
    %v474 = vrot.slane %v473, 4
    %v475 = vadd.f32 %v473, %v474
    %v476 = vrot.slane %v475, 2
    %v477 = vadd.f32 %v475, %v476
    %v478 = vrot.slane %v477, 1
    %v479 = vadd.f32 %v477, %v478
    %v480 = vsel %vm458, %v314, 0.0
    %v481 = vrot.slane %v480, 4
    %v482 = vadd.f32 %v480, %v481
    %v483 = vrot.slane %v482, 2
    %v484 = vadd.f32 %v482, %v483
    %v485 = vrot.slane %v484, 1
    %v486 = vadd.f32 %v484, %v485
    %v487 = vsel %vm458, %v383, 0.0
    %v488 = vrot.slane %v487, 4
    %v489 = vadd.f32 %v487, %v488
    %v490 = vrot.slane %v489, 2
    %v491 = vadd.f32 %v489, %v490
    %v492 = vrot.slane %v491, 1
    %v493 = vadd.f32 %v491, %v492
    %v494 = vsel %vm458, %v385, 0.0
    %v495 = vrot.slane %v494, 4
    %v496 = vadd.f32 %v494, %v495
    %v497 = vrot.slane %v496, 2
    %v498 = vadd.f32 %v496, %v497
    %v499 = vrot.slane %v498, 1
    %v500 = vadd.f32 %v498, %v499
    %v501 = vsel %vm458, %v454, 0.0
    %v502 = vrot.slane %v501, 4
    %v503 = vadd.f32 %v501, %v502
    %v504 = vrot.slane %v503, 2
    %v505 = vadd.f32 %v503, %v504
    %v506 = vrot.slane %v505, 1
    %v507 = vadd.f32 %v505, %v506
    %v508 = vsel %vm458, %v456, 0.0
    %v509 = vrot.slane %v508, 4
    %v510 = vadd.f32 %v508, %v509
    %v511 = vrot.slane %v510, 2
    %v512 = vadd.f32 %v510, %v511
    %v513 = vrot.slane %v512, 1
    %v514 = vadd.f32 %v512, %v513
    %v515 = vmul.f32 %v241, %v241
    %v516 = vmul.f32 %v243, %v243
    %v517 = vmul.f32 %v312, %v312
    %v518 = vmul.f32 %v314, %v314
    %v519 = vmul.f32 %v383, %v383
    %v520 = vmul.f32 %v385, %v385
    %v521 = vmul.f32 %v454, %v454
    %v522 = vmul.f32 %v456, %v456
    %v523 = vsel %vm458, %v515, 0.0
    %v524 = vrot.slane %v523, 4
    %v525 = vadd.f32 %v523, %v524
    %v526 = vrot.slane %v525, 2
    %v527 = vadd.f32 %v525, %v526
    %v528 = vrot.slane %v527, 1
    %v529 = vadd.f32 %v527, %v528
    %v530 = vsel %vm458, %v516, 0.0
    %v531 = vrot.slane %v530, 4
    %v532 = vadd.f32 %v530, %v531
    %v533 = vrot.slane %v532, 2
    %v534 = vadd.f32 %v532, %v533
    %v535 = vrot.slane %v534, 1
    %v536 = vadd.f32 %v534, %v535
    %v537 = vsel %vm458, %v517, 0.0
    %v538 = vrot.slane %v537, 4
    %v539 = vadd.f32 %v537, %v538
    %v540 = vrot.slane %v539, 2
    %v541 = vadd.f32 %v539, %v540
    %v542 = vrot.slane %v541, 1
    %v543 = vadd.f32 %v541, %v542
    %v544 = vsel %vm458, %v518, 0.0
    %v545 = vrot.slane %v544, 4
    %v546 = vadd.f32 %v544, %v545
    %v547 = vrot.slane %v546, 2
    %v548 = vadd.f32 %v546, %v547
    %v549 = vrot.slane %v548, 1
    %v550 = vadd.f32 %v548, %v549
    %v551 = vsel %vm458, %v519, 0.0
    %v552 = vrot.slane %v551, 4
    %v553 = vadd.f32 %v551, %v552
    %v554 = vrot.slane %v553, 2
    %v555 = vadd.f32 %v553, %v554
    %v556 = vrot.slane %v555, 1
    %v557 = vadd.f32 %v555, %v556
    %v558 = vsel %vm458, %v520, 0.0
    %v559 = vrot.slane %v558, 4
    %v560 = vadd.f32 %v558, %v559
    %v561 = vrot.slane %v560, 2
    %v562 = vadd.f32 %v560, %v561
    %v563 = vrot.slane %v562, 1
    %v564 = vadd.f32 %v562, %v563
    %v565 = vsel %vm458, %v521, 0.0
    %v566 = vrot.slane %v565, 4
    %v567 = vadd.f32 %v565, %v566
    %v568 = vrot.slane %v567, 2
    %v569 = vadd.f32 %v567, %v568
    %v570 = vrot.slane %v569, 1
    %v571 = vadd.f32 %v569, %v570
    %v572 = vsel %vm458, %v522, 0.0
    %v573 = vrot.slane %v572, 4
    %v574 = vadd.f32 %v572, %v573
    %v575 = vrot.slane %v574, 2
    %v576 = vadd.f32 %v574, %v575
    %v577 = vrot.slane %v576, 1
    %v578 = vadd.f32 %v576, %v577
    %v579 = vlaneseq
    %v580 = vshrl.u32 %v579, 7
    %v581 = vadd.s32 %v580, 8
    %v582 = vadd.s32 %v580, 16
    %v583 = vadd.s32 %v580, 24
    %v584 = vadd.s32 %v580, 32
    %v585 = vadd.s32 %v580, 40
    %v586 = vadd.s32 %v580, 48
    %v587 = vadd.s32 %v580, 56
    %v588 = vlaneseq
    %v589 = vand.u32 %v588, 127
    %v590 = vadd.s32 %v589, 128
    %v591 = vadd.s32 %v589, 256
    %v592 = vadd.s32 %v589, 384
    %v593 = vadd.s32 %v589, 512
    %v594 = vadd.s32 %v589, 640
    %v595 = vadd.s32 %v589, 768
    %v596 = vadd.s32 %v589, 896
    %v597 = vshra.s32 %v589, 4
    %v598 = vshra.s32 %v590, 4
    %v599 = vshra.s32 %v591, 4
    %v600 = vshra.s32 %v592, 4
    %v601 = vshra.s32 %v593, 4
    %v602 = vshra.s32 %v594, 4
    %v603 = vshra.s32 %v595, 4
    %v604 = vshra.s32 %v596, 4
    %vm605 = vcmp.eq.s32.totalorder %v597, %v580
    %vm606 = vcmp.eq.s32.totalorder %v598, %v580
    %vm607 = vcmp.eq.s32.totalorder %v599, %v580
    %vm608 = vcmp.eq.s32.totalorder %v600, %v580
    %vm609 = vcmp.eq.s32.totalorder %v601, %v580
    %vm610 = vcmp.eq.s32.totalorder %v602, %v580
    %vm611 = vcmp.eq.s32.totalorder %v603, %v580
    %vm612 = vcmp.eq.s32.totalorder %v604, %v580
    %vm613 = vcmp.eq.s32.totalorder %v597, %v581
    %vm614 = vcmp.eq.s32.totalorder %v598, %v581
    %vm615 = vcmp.eq.s32.totalorder %v599, %v581
    %vm616 = vcmp.eq.s32.totalorder %v600, %v581
    %vm617 = vcmp.eq.s32.totalorder %v601, %v581
    %vm618 = vcmp.eq.s32.totalorder %v602, %v581
    %vm619 = vcmp.eq.s32.totalorder %v603, %v581
    %vm620 = vcmp.eq.s32.totalorder %v604, %v581
    %vm621 = vcmp.eq.s32.totalorder %v597, %v582
    %vm622 = vcmp.eq.s32.totalorder %v598, %v582
    %vm623 = vcmp.eq.s32.totalorder %v599, %v582
    %vm624 = vcmp.eq.s32.totalorder %v600, %v582
    %vm625 = vcmp.eq.s32.totalorder %v601, %v582
    %vm626 = vcmp.eq.s32.totalorder %v602, %v582
    %vm627 = vcmp.eq.s32.totalorder %v603, %v582
    %vm628 = vcmp.eq.s32.totalorder %v604, %v582
    %vm629 = vcmp.eq.s32.totalorder %v597, %v583
    %vm630 = vcmp.eq.s32.totalorder %v598, %v583
    %vm631 = vcmp.eq.s32.totalorder %v599, %v583
    %vm632 = vcmp.eq.s32.totalorder %v600, %v583
    %vm633 = vcmp.eq.s32.totalorder %v601, %v583
    %vm634 = vcmp.eq.s32.totalorder %v602, %v583
    %vm635 = vcmp.eq.s32.totalorder %v603, %v583
    %vm636 = vcmp.eq.s32.totalorder %v604, %v583
    %vm637 = vcmp.eq.s32.totalorder %v597, %v584
    %vm638 = vcmp.eq.s32.totalorder %v598, %v584
    %vm639 = vcmp.eq.s32.totalorder %v599, %v584
    %vm640 = vcmp.eq.s32.totalorder %v600, %v584
    %vm641 = vcmp.eq.s32.totalorder %v601, %v584
    %vm642 = vcmp.eq.s32.totalorder %v602, %v584
    %vm643 = vcmp.eq.s32.totalorder %v603, %v584
    %vm644 = vcmp.eq.s32.totalorder %v604, %v584
    %vm645 = vcmp.eq.s32.totalorder %v597, %v585
    %vm646 = vcmp.eq.s32.totalorder %v598, %v585
    %vm647 = vcmp.eq.s32.totalorder %v599, %v585
    %vm648 = vcmp.eq.s32.totalorder %v600, %v585
    %vm649 = vcmp.eq.s32.totalorder %v601, %v585
    %vm650 = vcmp.eq.s32.totalorder %v602, %v585
    %vm651 = vcmp.eq.s32.totalorder %v603, %v585
    %vm652 = vcmp.eq.s32.totalorder %v604, %v585
    %vm653 = vcmp.eq.s32.totalorder %v597, %v586
    %vm654 = vcmp.eq.s32.totalorder %v598, %v586
    %vm655 = vcmp.eq.s32.totalorder %v599, %v586
    %vm656 = vcmp.eq.s32.totalorder %v600, %v586
    %vm657 = vcmp.eq.s32.totalorder %v601, %v586
    %vm658 = vcmp.eq.s32.totalorder %v602, %v586
    %vm659 = vcmp.eq.s32.totalorder %v603, %v586
    %vm660 = vcmp.eq.s32.totalorder %v604, %v586
    %vm661 = vcmp.eq.s32.totalorder %v597, %v587
    %vm662 = vcmp.eq.s32.totalorder %v598, %v587
    %vm663 = vcmp.eq.s32.totalorder %v599, %v587
    %vm664 = vcmp.eq.s32.totalorder %v600, %v587
    %vm665 = vcmp.eq.s32.totalorder %v601, %v587
    %vm666 = vcmp.eq.s32.totalorder %v602, %v587
    %vm667 = vcmp.eq.s32.totalorder %v603, %v587
    %vm668 = vcmp.eq.s32.totalorder %v604, %v587
    %v669 = vsel %vm605, 1, 0
    %v670 = vsel %vm606, 1, 0
    %v671 = vsel %vm607, 1, 0
    %v672 = vsel %vm608, 1, 0
    %v673 = vsel %vm609, 1, 0
    %v674 = vsel %vm610, 1, 0
    %v675 = vsel %vm611, 1, 0
    %v676 = vsel %vm612, 1, 0
    %v677 = vsel %vm613, 1, 0
    %v678 = vsel %vm614, 1, 0
    %v679 = vsel %vm615, 1, 0
    %v680 = vsel %vm616, 1, 0
    %v681 = vsel %vm617, 1, 0
    %v682 = vsel %vm618, 1, 0
    %v683 = vsel %vm619, 1, 0
    %v684 = vsel %vm620, 1, 0
    %v685 = vsel %vm621, 1, 0
    %v686 = vsel %vm622, 1, 0
    %v687 = vsel %vm623, 1, 0
    %v688 = vsel %vm624, 1, 0
    %v689 = vsel %vm625, 1, 0
    %v690 = vsel %vm626, 1, 0
    %v691 = vsel %vm627, 1, 0
    %v692 = vsel %vm628, 1, 0
    %v693 = vsel %vm629, 1, 0
    %v694 = vsel %vm630, 1, 0
    %v695 = vsel %vm631, 1, 0
    %v696 = vsel %vm632, 1, 0
    %v697 = vsel %vm633, 1, 0
    %v698 = vsel %vm634, 1, 0
    %v699 = vsel %vm635, 1, 0
    %v700 = vsel %vm636, 1, 0
    %v701 = vsel %vm637, 1, 0
    %v702 = vsel %vm638, 1, 0
    %v703 = vsel %vm639, 1, 0
    %v704 = vsel %vm640, 1, 0
    %v705 = vsel %vm641, 1, 0
    %v706 = vsel %vm642, 1, 0
    %v707 = vsel %vm643, 1, 0
    %v708 = vsel %vm644, 1, 0
    %v709 = vsel %vm645, 1, 0
    %v710 = vsel %vm646, 1, 0
    %v711 = vsel %vm647, 1, 0
    %v712 = vsel %vm648, 1, 0
    %v713 = vsel %vm649, 1, 0
    %v714 = vsel %vm650, 1, 0
    %v715 = vsel %vm651, 1, 0
    %v716 = vsel %vm652, 1, 0
    %v717 = vsel %vm653, 1, 0
    %v718 = vsel %vm654, 1, 0
    %v719 = vsel %vm655, 1, 0
    %v720 = vsel %vm656, 1, 0
    %v721 = vsel %vm657, 1, 0
    %v722 = vsel %vm658, 1, 0
    %v723 = vsel %vm659, 1, 0
    %v724 = vsel %vm660, 1, 0
    %v725 = vsel %vm661, 1, 0
    %v726 = vsel %vm662, 1, 0
    %v727 = vsel %vm663, 1, 0
    %v728 = vsel %vm664, 1, 0
    %v729 = vsel %vm665, 1, 0
    %v730 = vsel %vm666, 1, 0
    %v731 = vsel %vm667, 1, 0
    %v732 = vsel %vm668, 1, 0
    %v733 = vcvt.s32.f32 %v669
    %v734 = vcvt.s32.f32 %v670
    %v735 = vcvt.s32.f32 %v671
    %v736 = vcvt.s32.f32 %v672
    %v737 = vcvt.s32.f32 %v673
    %v738 = vcvt.s32.f32 %v674
    %v739 = vcvt.s32.f32 %v675
    %v740 = vcvt.s32.f32 %v676
    %v741 = vcvt.s32.f32 %v677
    %v742 = vcvt.s32.f32 %v678
    %v743 = vcvt.s32.f32 %v679
    %v744 = vcvt.s32.f32 %v680
    %v745 = vcvt.s32.f32 %v681
    %v746 = vcvt.s32.f32 %v682
    %v747 = vcvt.s32.f32 %v683
    %v748 = vcvt.s32.f32 %v684
    %v749 = vcvt.s32.f32 %v685
    %v750 = vcvt.s32.f32 %v686
    %v751 = vcvt.s32.f32 %v687
    %v752 = vcvt.s32.f32 %v688
    %v753 = vcvt.s32.f32 %v689
    %v754 = vcvt.s32.f32 %v690
    %v755 = vcvt.s32.f32 %v691
    %v756 = vcvt.s32.f32 %v692
    %v757 = vcvt.s32.f32 %v693
    %v758 = vcvt.s32.f32 %v694
    %v759 = vcvt.s32.f32 %v695
    %v760 = vcvt.s32.f32 %v696
    %v761 = vcvt.s32.f32 %v697
    %v762 = vcvt.s32.f32 %v698
    %v763 = vcvt.s32.f32 %v699
    %v764 = vcvt.s32.f32 %v700
    %v765 = vcvt.s32.f32 %v701
    %v766 = vcvt.s32.f32 %v702
    %v767 = vcvt.s32.f32 %v703
    %v768 = vcvt.s32.f32 %v704
    %v769 = vcvt.s32.f32 %v705
    %v770 = vcvt.s32.f32 %v706
    %v771 = vcvt.s32.f32 %v707
    %v772 = vcvt.s32.f32 %v708
    %v773 = vcvt.s32.f32 %v709
    %v774 = vcvt.s32.f32 %v710
    %v775 = vcvt.s32.f32 %v711
    %v776 = vcvt.s32.f32 %v712
    %v777 = vcvt.s32.f32 %v713
    %v778 = vcvt.s32.f32 %v714
    %v779 = vcvt.s32.f32 %v715
    %v780 = vcvt.s32.f32 %v716
    %v781 = vcvt.s32.f32 %v717
    %v782 = vcvt.s32.f32 %v718
    %v783 = vcvt.s32.f32 %v719
    %v784 = vcvt.s32.f32 %v720
    %v785 = vcvt.s32.f32 %v721
    %v786 = vcvt.s32.f32 %v722
    %v787 = vcvt.s32.f32 %v723
    %v788 = vcvt.s32.f32 %v724
    %v789 = vcvt.s32.f32 %v725
    %v790 = vcvt.s32.f32 %v726
    %v791 = vcvt.s32.f32 %v727
    %v792 = vcvt.s32.f32 %v728
    %v793 = vcvt.s32.f32 %v729
    %v794 = vcvt.s32.f32 %v730
    %v795 = vcvt.s32.f32 %v731
    %v796 = vcvt.s32.f32 %v732
    %vm797 = vcmask 1040384
    %v798 = vsel %vm797, %v465, %v529
    %v799 = vsel %vm797, %v472, %v536
    %v800 = vsel %vm797, %v479, %v543
    %v801 = vsel %vm797, %v486, %v550
    %v802 = vsel %vm797, %v493, %v557
    %v803 = vsel %vm797, %v500, %v564
    %v804 = vsel %vm797, %v507, %v571
    %v805 = vsel %vm797, %v514, %v578
    %806 = vmatprep.subr.mxu0 %v734
    %807 = vmatpush1.xpose.msra.mxu0 %v733
    %808 = vmatprep.subr.mxu0 %v742
    %809 = vmatpush1.xpose.msra.mxu0 %v741
    %810 = vmatprep.subr.mxu0 %v750
    %811 = vmatpush1.xpose.msra.mxu0 %v749
    %812 = vmatprep.subr.mxu0 %v758
    %813 = vmatpush1.xpose.msra.mxu0 %v757
    %814 = vmatprep.subr.mxu0 %v766
    %815 = vmatpush1.xpose.msra.mxu0 %v765
    %816 = vmatprep.subr.mxu0 %v774
    %817 = vmatpush1.xpose.msra.mxu0 %v773
    %818 = vmatprep.subr.mxu0 %v782
    %819 = vmatpush1.xpose.msra.mxu0 %v781
    %820 = vmatprep.subr.mxu0 %v790
    %821 = vmatpush1.xpose.msra.mxu0 %v789
    %822 = vmatprep.subr.mxu0 0.0
    %823 = vmatpush1.xpose.msra.mxu0 0.0
    %824 = vmatprep.subr.mxu0 0.0
    %825 = vmatpush1.xpose.msra.mxu0 0.0
    %826 = vmatprep.subr.mxu0 0.0
    %827 = vmatpush1.xpose.msra.mxu0 0.0
    %828 = vmatprep.subr.mxu0 0.0
    %829 = vmatpush1.xpose.msra.mxu0 0.0
    %830 = vmatprep.subr.mxu0 0.0
    %831 = vmatpush1.xpose.msra.mxu0 0.0
    %832 = vmatprep.subr.mxu0 0.0
    %833 = vmatpush1.xpose.msra.mxu0 0.0
    %834 = vmatprep.subr.mxu0 0.0
    %835 = vmatpush1.xpose.msra.mxu0 0.0
    %836 = vmatprep.subr.mxu0 0.0
    %837 = vmatpush1.xpose.msra.mxu0 0.0
    %838 = vmatprep.subr.mxu0 0.0
    %839 = vmatpush1.xpose.msra.mxu0 0.0
    %840 = vmatprep.subr.mxu0 0.0
    %841 = vmatpush1.xpose.msra.mxu0 0.0
    %842 = vmatprep.subr.mxu0 0.0
    %843 = vmatpush1.xpose.msra.mxu0 0.0
    %844 = vmatprep.subr.mxu0 0.0
    %845 = vmatpush1.xpose.msra.mxu0 0.0
    %846 = vmatprep.subr.mxu0 0.0
    %847 = vmatpush1.xpose.msra.mxu0 0.0
    %848 = vmatprep.subr.mxu0 0.0
    %849 = vmatpush1.xpose.msra.mxu0 0.0
    %850 = vmatprep.subr.mxu0 0.0
    %851 = vmatpush1.xpose.msra.mxu0 0.0
    %852 = vmatprep.subr.mxu0 0.0
    %853 = vmatpush1.xpose.msra.mxu0 0.0
    %854 = vmatprep.subr.mxu0 0.0
    %855 = vmatpush1.xpose.msra.mxu0 0.0
    %856 = vmatprep.subr.mxu0 0.0
    %857 = vmatpush1.xpose.msra.mxu0 0.0
    %858 = vmatprep.subr.mxu0 0.0
    %859 = vmatpush1.xpose.msra.mxu0 0.0
    %860 = vmatprep.subr.mxu0 0.0
    %861 = vmatpush1.xpose.msra.mxu0 0.0
    %862 = vmatprep.subr.mxu0 0.0
    %863 = vmatpush1.xpose.msra.mxu0 0.0
    %864 = vmatprep.subr.mxu0 0.0
    %865 = vmatpush1.xpose.msra.mxu0 0.0
    %866 = vmatprep.subr.mxu0 0.0
    %867 = vmatpush1.xpose.msra.mxu0 0.0
    %868 = vmatprep.subr.mxu0 0.0
    %869 = vmatpush1.xpose.msra.mxu0 0.0
    %870 = vmatprep.mubr.f32.mxu0 %v799
    %871 = vmatmul.mubr.f32.gmra.mrb[0].mxu0 %v798
    %v872 = vpop.f32.mrb[0].mxu0
    %v873 = vadd.f32 0.0, %v872
    %v874 = vpop.f32.mrb[0].mxu0
    %875 = vdwg.mxu0
    %876 = vmatprep.subr.mxu0 %v736
    %877 = vmatpush1.xpose.msra.mxu0 %v735
    %878 = vmatprep.subr.mxu0 %v744
    %879 = vmatpush1.xpose.msra.mxu0 %v743
    %880 = vmatprep.subr.mxu0 %v752
    %881 = vmatpush1.xpose.msra.mxu0 %v751
    %882 = vmatprep.subr.mxu0 %v760
    %883 = vmatpush1.xpose.msra.mxu0 %v759
    %884 = vmatprep.subr.mxu0 %v768
    %885 = vmatpush1.xpose.msra.mxu0 %v767
    %886 = vmatprep.subr.mxu0 %v776
    %887 = vmatpush1.xpose.msra.mxu0 %v775
    %888 = vmatprep.subr.mxu0 %v784
    %889 = vmatpush1.xpose.msra.mxu0 %v783
    %890 = vmatprep.subr.mxu0 %v792
    %891 = vmatpush1.xpose.msra.mxu0 %v791
    %892 = vmatprep.subr.mxu0 0.0
    %893 = vmatpush1.xpose.msra.mxu0 0.0
    %894 = vmatprep.subr.mxu0 0.0
    %895 = vmatpush1.xpose.msra.mxu0 0.0
    %896 = vmatprep.subr.mxu0 0.0
    %897 = vmatpush1.xpose.msra.mxu0 0.0
    %898 = vmatprep.subr.mxu0 0.0
    %899 = vmatpush1.xpose.msra.mxu0 0.0
    %900 = vmatprep.subr.mxu0 0.0
    %901 = vmatpush1.xpose.msra.mxu0 0.0
    %902 = vmatprep.subr.mxu0 0.0
    %903 = vmatpush1.xpose.msra.mxu0 0.0
    %904 = vmatprep.subr.mxu0 0.0
    %905 = vmatpush1.xpose.msra.mxu0 0.0
    %906 = vmatprep.subr.mxu0 0.0
    %907 = vmatpush1.xpose.msra.mxu0 0.0
    %908 = vmatprep.subr.mxu0 0.0
    %909 = vmatpush1.xpose.msra.mxu0 0.0
    %910 = vmatprep.subr.mxu0 0.0
    %911 = vmatpush1.xpose.msra.mxu0 0.0
    %912 = vmatprep.subr.mxu0 0.0
    %913 = vmatpush1.xpose.msra.mxu0 0.0
    %914 = vmatprep.subr.mxu0 0.0
    %915 = vmatpush1.xpose.msra.mxu0 0.0
    %916 = vmatprep.subr.mxu0 0.0
    %917 = vmatpush1.xpose.msra.mxu0 0.0
    %918 = vmatprep.subr.mxu0 0.0
    %919 = vmatpush1.xpose.msra.mxu0 0.0
    %920 = vmatprep.subr.mxu0 0.0
    %921 = vmatpush1.xpose.msra.mxu0 0.0
    %922 = vmatprep.subr.mxu0 0.0
    %923 = vmatpush1.xpose.msra.mxu0 0.0
    %924 = vmatprep.subr.mxu0 0.0
    %925 = vmatpush1.xpose.msra.mxu0 0.0
    %926 = vmatprep.subr.mxu0 0.0
    %927 = vmatpush1.xpose.msra.mxu0 0.0
    %928 = vmatprep.subr.mxu0 0.0
    %929 = vmatpush1.xpose.msra.mxu0 0.0
    %930 = vmatprep.subr.mxu0 0.0
    %931 = vmatpush1.xpose.msra.mxu0 0.0
    %932 = vmatprep.subr.mxu0 0.0
    %933 = vmatpush1.xpose.msra.mxu0 0.0
    %934 = vmatprep.subr.mxu0 0.0
    %935 = vmatpush1.xpose.msra.mxu0 0.0
    %936 = vmatprep.subr.mxu0 0.0
    %937 = vmatpush1.xpose.msra.mxu0 0.0
    %938 = vmatprep.subr.mxu0 0.0
    %939 = vmatpush1.xpose.msra.mxu0 0.0
    %940 = vmatprep.mubr.f32.mxu0 %v801
    %941 = vmatmul.mubr.f32.gmra.mrb[0].mxu0 %v800
    %v942 = vpop.f32.mrb[0].mxu0
    %v943 = vadd.f32 %v873, %v942
    %v944 = vpop.f32.mrb[0].mxu0
    %945 = vdwg.mxu0
    %946 = vmatprep.subr.mxu0 %v738
    %947 = vmatpush1.xpose.msra.mxu0 %v737
    %948 = vmatprep.subr.mxu0 %v746
    %949 = vmatpush1.xpose.msra.mxu0 %v745
    %950 = vmatprep.subr.mxu0 %v754
    %951 = vmatpush1.xpose.msra.mxu0 %v753
    %952 = vmatprep.subr.mxu0 %v762
    %953 = vmatpush1.xpose.msra.mxu0 %v761
    %954 = vmatprep.subr.mxu0 %v770
    %955 = vmatpush1.xpose.msra.mxu0 %v769
    %956 = vmatprep.subr.mxu0 %v778
    %957 = vmatpush1.xpose.msra.mxu0 %v777
    %958 = vmatprep.subr.mxu0 %v786
    %959 = vmatpush1.xpose.msra.mxu0 %v785
    %960 = vmatprep.subr.mxu0 %v794
    %961 = vmatpush1.xpose.msra.mxu0 %v793
    %962 = vmatprep.subr.mxu0 0.0
    %963 = vmatpush1.xpose.msra.mxu0 0.0
    %964 = vmatprep.subr.mxu0 0.0
    %965 = vmatpush1.xpose.msra.mxu0 0.0
    %966 = vmatprep.subr.mxu0 0.0
    %967 = vmatpush1.xpose.msra.mxu0 0.0
    %968 = vmatprep.subr.mxu0 0.0
    %969 = vmatpush1.xpose.msra.mxu0 0.0
    %970 = vmatprep.subr.mxu0 0.0
    %971 = vmatpush1.xpose.msra.mxu0 0.0
    %972 = vmatprep.subr.mxu0 0.0
    %973 = vmatpush1.xpose.msra.mxu0 0.0
    %974 = vmatprep.subr.mxu0 0.0
    %975 = vmatpush1.xpose.msra.mxu0 0.0
    %976 = vmatprep.subr.mxu0 0.0
    %977 = vmatpush1.xpose.msra.mxu0 0.0
    %978 = vmatprep.subr.mxu0 0.0
    %979 = vmatpush1.xpose.msra.mxu0 0.0
    %980 = vmatprep.subr.mxu0 0.0
    %981 = vmatpush1.xpose.msra.mxu0 0.0
    %982 = vmatprep.subr.mxu0 0.0
    %983 = vmatpush1.xpose.msra.mxu0 0.0
    %984 = vmatprep.subr.mxu0 0.0
    %985 = vmatpush1.xpose.msra.mxu0 0.0
    %986 = vmatprep.subr.mxu0 0.0
    %987 = vmatpush1.xpose.msra.mxu0 0.0
    %988 = vmatprep.subr.mxu0 0.0
    %989 = vmatpush1.xpose.msra.mxu0 0.0
    %990 = vmatprep.subr.mxu0 0.0
    %991 = vmatpush1.xpose.msra.mxu0 0.0
    %992 = vmatprep.subr.mxu0 0.0
    %993 = vmatpush1.xpose.msra.mxu0 0.0
    %994 = vmatprep.subr.mxu0 0.0
    %995 = vmatpush1.xpose.msra.mxu0 0.0
    %996 = vmatprep.subr.mxu0 0.0
    %997 = vmatpush1.xpose.msra.mxu0 0.0
    %998 = vmatprep.subr.mxu0 0.0
    %999 = vmatpush1.xpose.msra.mxu0 0.0
    %1000 = vmatprep.subr.mxu0 0.0
    %1001 = vmatpush1.xpose.msra.mxu0 0.0
    %1002 = vmatprep.subr.mxu0 0.0
    %1003 = vmatpush1.xpose.msra.mxu0 0.0
    %1004 = vmatprep.subr.mxu0 0.0
    %1005 = vmatpush1.xpose.msra.mxu0 0.0
    %1006 = vmatprep.subr.mxu0 0.0
    %1007 = vmatpush1.xpose.msra.mxu0 0.0
    %1008 = vmatprep.subr.mxu0 0.0
    %1009 = vmatpush1.xpose.msra.mxu0 0.0
    %1010 = vmatprep.mubr.f32.mxu0 %v803
    %1011 = vmatmul.mubr.f32.gmra.mrb[0].mxu0 %v802
    %v1012 = vpop.f32.mrb[0].mxu0
    %v1013 = vadd.f32 %v943, %v1012
    %v1014 = vpop.f32.mrb[0].mxu0
    %1015 = vdwg.mxu0
    %1016 = vmatprep.subr.mxu0 %v740
    %1017 = vmatpush1.xpose.msra.mxu0 %v739
    %1018 = vmatprep.subr.mxu0 %v748
    %1019 = vmatpush1.xpose.msra.mxu0 %v747
    %1020 = vmatprep.subr.mxu0 %v756
    %1021 = vmatpush1.xpose.msra.mxu0 %v755
    %1022 = vmatprep.subr.mxu0 %v764
    %1023 = vmatpush1.xpose.msra.mxu0 %v763
    %1024 = vmatprep.subr.mxu0 %v772
    %1025 = vmatpush1.xpose.msra.mxu0 %v771
    %1026 = vmatprep.subr.mxu0 %v780
    %1027 = vmatpush1.xpose.msra.mxu0 %v779
    %1028 = vmatprep.subr.mxu0 %v788
    %1029 = vmatpush1.xpose.msra.mxu0 %v787
    %1030 = vmatprep.subr.mxu0 %v796
    %1031 = vmatpush1.xpose.msra.mxu0 %v795
    %1032 = vmatprep.subr.mxu0 0.0
    %1033 = vmatpush1.xpose.msra.mxu0 0.0
    %1034 = vmatprep.subr.mxu0 0.0
    %1035 = vmatpush1.xpose.msra.mxu0 0.0
    %1036 = vmatprep.subr.mxu0 0.0
    %1037 = vmatpush1.xpose.msra.mxu0 0.0
    %1038 = vmatprep.subr.mxu0 0.0
    %1039 = vmatpush1.xpose.msra.mxu0 0.0
    %1040 = vmatprep.subr.mxu0 0.0
    %1041 = vmatpush1.xpose.msra.mxu0 0.0
    %1042 = vmatprep.subr.mxu0 0.0
    %1043 = vmatpush1.xpose.msra.mxu0 0.0
    %1044 = vmatprep.subr.mxu0 0.0
    %1045 = vmatpush1.xpose.msra.mxu0 0.0
    %1046 = vmatprep.subr.mxu0 0.0
    %1047 = vmatpush1.xpose.msra.mxu0 0.0
    %1048 = vmatprep.subr.mxu0 0.0
    %1049 = vmatpush1.xpose.msra.mxu0 0.0
    %1050 = vmatprep.subr.mxu0 0.0
    %1051 = vmatpush1.xpose.msra.mxu0 0.0
    %1052 = vmatprep.subr.mxu0 0.0
    %1053 = vmatpush1.xpose.msra.mxu0 0.0
    %1054 = vmatprep.subr.mxu0 0.0
    %1055 = vmatpush1.xpose.msra.mxu0 0.0
    %1056 = vmatprep.subr.mxu0 0.0
    %1057 = vmatpush1.xpose.msra.mxu0 0.0
    %1058 = vmatprep.subr.mxu0 0.0
    %1059 = vmatpush1.xpose.msra.mxu0 0.0
    %1060 = vmatprep.subr.mxu0 0.0
    %1061 = vmatpush1.xpose.msra.mxu0 0.0
    %1062 = vmatprep.subr.mxu0 0.0
    %1063 = vmatpush1.xpose.msra.mxu0 0.0
    %1064 = vmatprep.subr.mxu0 0.0
    %1065 = vmatpush1.xpose.msra.mxu0 0.0
    %1066 = vmatprep.subr.mxu0 0.0
    %1067 = vmatpush1.xpose.msra.mxu0 0.0
    %1068 = vmatprep.subr.mxu0 0.0
    %1069 = vmatpush1.xpose.msra.mxu0 0.0
    %1070 = vmatprep.subr.mxu0 0.0
    %1071 = vmatpush1.xpose.msra.mxu0 0.0
    %1072 = vmatprep.subr.mxu0 0.0
    %1073 = vmatpush1.xpose.msra.mxu0 0.0
    %1074 = vmatprep.subr.mxu0 0.0
    %1075 = vmatpush1.xpose.msra.mxu0 0.0
    %1076 = vmatprep.subr.mxu0 0.0
    %1077 = vmatpush1.xpose.msra.mxu0 0.0
    %1078 = vmatprep.subr.mxu0 0.0
    %1079 = vmatpush1.xpose.msra.mxu0 0.0
    %1080 = vmatprep.mubr.f32.mxu0 %v805
    %1081 = vmatmul.mubr.f32.gmra.mrb[0].mxu0 %v804
    %v1082 = vpop.f32.mrb[0].mxu0
    %v1083 = vadd.f32 %v1013, %v1082
    %v1084 = vpop.f32.mrb[0].mxu0
    %1085 = vdwg.mxu0
    %v1086 = vmul.f32 %v1083, 0.03125
    %v1087 = vmul.f32 %v1086, %v1086
    %v1089 = vrot.slane %v1087, 7
    %v1091 = vsub.f32 %v1086, %v1089
    %v1092 = vmax.f32 %v1091, 0.0
    %v1093 = vld [vmem:[%s2] sm:$0x1]
    %v1094 = vadd.f32 %v1092, 1e-05
    %v1095 = vrsqrt.pop %v1094
    %v1097 = vrot.slane %v1095, 1
    %v1099 = vmul.f32 %v1093, %v1097
    %v1100 = vld [vmem:[%s2 + $0x1] sm:$0x1]
    %v1101 = vmul.f32 %v1086, %v1099
    %v1102 = vsub.f32 %v1100, %v1101
    %v1104 = vrot.slane %v1102, 7
    %v1106 = vsel %vm797, %v1099, %v1104
    %vm1107 = vcmask 523264
    %v1109 = vsel %vm1107, %v1106, 0
    %1111 = vmatprep.subr.mxu0 %v734
    %1112 = vmatpush1.msra.mxu0 %v733
    %1113 = vmatprep.subr.mxu0 %v742
    %1114 = vmatpush1.msra.mxu0 %v741
    %1115 = vmatprep.subr.mxu0 %v750
    %1116 = vmatpush1.msra.mxu0 %v749
    %1117 = vmatprep.subr.mxu0 %v758
    %1118 = vmatpush1.msra.mxu0 %v757
    %1119 = vmatprep.subr.mxu0 %v766
    %1120 = vmatpush1.msra.mxu0 %v765
    %1121 = vmatprep.subr.mxu0 %v774
    %1122 = vmatpush1.msra.mxu0 %v773
    %1123 = vmatprep.subr.mxu0 %v782
    %1124 = vmatpush1.msra.mxu0 %v781
    %1125 = vmatprep.subr.mxu0 %v790
    %1126 = vmatpush1.msra.mxu0 %v789
    %1127 = vmatprep.subr.mxu0 0.0
    %1128 = vmatpush1.msra.mxu0 0.0
    %1129 = vmatprep.subr.mxu0 0.0
    %1130 = vmatpush1.msra.mxu0 0.0
    %1131 = vmatprep.subr.mxu0 0.0
    %1132 = vmatpush1.msra.mxu0 0.0
    %1133 = vmatprep.subr.mxu0 0.0
    %1134 = vmatpush1.msra.mxu0 0.0
    %1135 = vmatprep.subr.mxu0 0.0
    %1136 = vmatpush1.msra.mxu0 0.0
    %1137 = vmatprep.subr.mxu0 0.0
    %1138 = vmatpush1.msra.mxu0 0.0
    %1139 = vmatprep.subr.mxu0 0.0
    %1140 = vmatpush1.msra.mxu0 0.0
    %1141 = vmatprep.subr.mxu0 0.0
    %1142 = vmatpush1.msra.mxu0 0.0
    %1143 = vmatprep.subr.mxu0 0.0
    %1144 = vmatpush1.msra.mxu0 0.0
    %1145 = vmatprep.subr.mxu0 0.0
    %1146 = vmatpush1.msra.mxu0 0.0
    %1147 = vmatprep.subr.mxu0 0.0
    %1148 = vmatpush1.msra.mxu0 0.0
    %1149 = vmatprep.subr.mxu0 0.0
    %1150 = vmatpush1.msra.mxu0 0.0
    %1151 = vmatprep.subr.mxu0 0.0
    %1152 = vmatpush1.msra.mxu0 0.0
    %1153 = vmatprep.subr.mxu0 0.0
    %1154 = vmatpush1.msra.mxu0 0.0
    %1155 = vmatprep.subr.mxu0 0.0
    %1156 = vmatpush1.msra.mxu0 0.0
    %1157 = vmatprep.subr.mxu0 0.0
    %1158 = vmatpush1.msra.mxu0 0.0
    %1159 = vmatprep.subr.mxu0 0.0
    %1160 = vmatpush1.msra.mxu0 0.0
    %1161 = vmatprep.subr.mxu0 0.0
    %1162 = vmatpush1.msra.mxu0 0.0
    %1163 = vmatprep.subr.mxu0 0.0
    %1164 = vmatpush1.msra.mxu0 0.0
    %1165 = vmatprep.subr.mxu0 0.0
    %1166 = vmatpush1.msra.mxu0 0.0
    %1167 = vmatprep.subr.mxu0 0.0
    %1168 = vmatpush1.msra.mxu0 0.0
    %1169 = vmatprep.subr.mxu0 0.0
    %1170 = vmatpush1.msra.mxu0 0.0
    %1171 = vmatprep.subr.mxu0 0.0
    %1172 = vmatpush1.msra.mxu0 0.0
    %1173 = vmatprep.subr.mxu0 0.0
    %1174 = vmatpush1.msra.mxu0 0.0
    %1175 = vmatprep.mubr.f32.mxu0 0.0
    %1176 = vmatmul.mubr.f32.gmra.mrb[0].mxu0 %v1109
    %v1177 = vpop.f32.mrb[0].mxu0
    %v1178 = vadd.f32 0.0, %v1177
    %v1179 = vpop.f32.mrb[0].mxu0
    %v1180 = vadd.f32 0.0, %v1179
    %1181 = vdwg.mxu0
    %1182 = vmatprep.subr.mxu0 %v736
    %1183 = vmatpush1.msra.mxu0 %v735
    %1184 = vmatprep.subr.mxu0 %v744
    %1185 = vmatpush1.msra.mxu0 %v743
    %1186 = vmatprep.subr.mxu0 %v752
    %1187 = vmatpush1.msra.mxu0 %v751
    %1188 = vmatprep.subr.mxu0 %v760
    %1189 = vmatpush1.msra.mxu0 %v759
    %1190 = vmatprep.subr.mxu0 %v768
    %1191 = vmatpush1.msra.mxu0 %v767
    %1192 = vmatprep.subr.mxu0 %v776
    %1193 = vmatpush1.msra.mxu0 %v775
    %1194 = vmatprep.subr.mxu0 %v784
    %1195 = vmatpush1.msra.mxu0 %v783
    %1196 = vmatprep.subr.mxu0 %v792
    %1197 = vmatpush1.msra.mxu0 %v791
    %1198 = vmatprep.subr.mxu0 0.0
    %1199 = vmatpush1.msra.mxu0 0.0
    %1200 = vmatprep.subr.mxu0 0.0
    %1201 = vmatpush1.msra.mxu0 0.0
    %1202 = vmatprep.subr.mxu0 0.0
    %1203 = vmatpush1.msra.mxu0 0.0
    %1204 = vmatprep.subr.mxu0 0.0
    %1205 = vmatpush1.msra.mxu0 0.0
    %1206 = vmatprep.subr.mxu0 0.0
    %1207 = vmatpush1.msra.mxu0 0.0
    %1208 = vmatprep.subr.mxu0 0.0
    %1209 = vmatpush1.msra.mxu0 0.0
    %1210 = vmatprep.subr.mxu0 0.0
    %1211 = vmatpush1.msra.mxu0 0.0
    %1212 = vmatprep.subr.mxu0 0.0
    %1213 = vmatpush1.msra.mxu0 0.0
    %1214 = vmatprep.subr.mxu0 0.0
    %1215 = vmatpush1.msra.mxu0 0.0
    %1216 = vmatprep.subr.mxu0 0.0
    %1217 = vmatpush1.msra.mxu0 0.0
    %1218 = vmatprep.subr.mxu0 0.0
    %1219 = vmatpush1.msra.mxu0 0.0
    %1220 = vmatprep.subr.mxu0 0.0
    %1221 = vmatpush1.msra.mxu0 0.0
    %1222 = vmatprep.subr.mxu0 0.0
    %1223 = vmatpush1.msra.mxu0 0.0
    %1224 = vmatprep.subr.mxu0 0.0
    %1225 = vmatpush1.msra.mxu0 0.0
    %1226 = vmatprep.subr.mxu0 0.0
    %1227 = vmatpush1.msra.mxu0 0.0
    %1228 = vmatprep.subr.mxu0 0.0
    %1229 = vmatpush1.msra.mxu0 0.0
    %1230 = vmatprep.subr.mxu0 0.0
    %1231 = vmatpush1.msra.mxu0 0.0
    %1232 = vmatprep.subr.mxu0 0.0
    %1233 = vmatpush1.msra.mxu0 0.0
    %1234 = vmatprep.subr.mxu0 0.0
    %1235 = vmatpush1.msra.mxu0 0.0
    %1236 = vmatprep.subr.mxu0 0.0
    %1237 = vmatpush1.msra.mxu0 0.0
    %1238 = vmatprep.subr.mxu0 0.0
    %1239 = vmatpush1.msra.mxu0 0.0
    %1240 = vmatprep.subr.mxu0 0.0
    %1241 = vmatpush1.msra.mxu0 0.0
    %1242 = vmatprep.subr.mxu0 0.0
    %1243 = vmatpush1.msra.mxu0 0.0
    %1244 = vmatprep.subr.mxu0 0.0
    %1245 = vmatpush1.msra.mxu0 0.0
    %1246 = vmatprep.mubr.f32.mxu0 0.0
    %1247 = vmatmul.mubr.f32.gmra.mrb[0].mxu0 %v1109
    %v1248 = vpop.f32.mrb[0].mxu0
    %v1249 = vadd.f32 0.0, %v1248
    %v1250 = vpop.f32.mrb[0].mxu0
    %v1251 = vadd.f32 0.0, %v1250
    %1252 = vdwg.mxu0
    %1253 = vmatprep.subr.mxu0 %v738
    %1254 = vmatpush1.msra.mxu0 %v737
    %1255 = vmatprep.subr.mxu0 %v746
    %1256 = vmatpush1.msra.mxu0 %v745
    %1257 = vmatprep.subr.mxu0 %v754
    %1258 = vmatpush1.msra.mxu0 %v753
    %1259 = vmatprep.subr.mxu0 %v762
    %1260 = vmatpush1.msra.mxu0 %v761
    %1261 = vmatprep.subr.mxu0 %v770
    %1262 = vmatpush1.msra.mxu0 %v769
    %1263 = vmatprep.subr.mxu0 %v778
    %1264 = vmatpush1.msra.mxu0 %v777
    %1265 = vmatprep.subr.mxu0 %v786
    %1266 = vmatpush1.msra.mxu0 %v785
    %1267 = vmatprep.subr.mxu0 %v794
    %1268 = vmatpush1.msra.mxu0 %v793
    %1269 = vmatprep.subr.mxu0 0.0
    %1270 = vmatpush1.msra.mxu0 0.0
    %1271 = vmatprep.subr.mxu0 0.0
    %1272 = vmatpush1.msra.mxu0 0.0
    %1273 = vmatprep.subr.mxu0 0.0
    %1274 = vmatpush1.msra.mxu0 0.0
    %1275 = vmatprep.subr.mxu0 0.0
    %1276 = vmatpush1.msra.mxu0 0.0
    %1277 = vmatprep.subr.mxu0 0.0
    %1278 = vmatpush1.msra.mxu0 0.0
    %1279 = vmatprep.subr.mxu0 0.0
    %1280 = vmatpush1.msra.mxu0 0.0
    %1281 = vmatprep.subr.mxu0 0.0
    %1282 = vmatpush1.msra.mxu0 0.0
    %1283 = vmatprep.subr.mxu0 0.0
    %1284 = vmatpush1.msra.mxu0 0.0
    %1285 = vmatprep.subr.mxu0 0.0
    %1286 = vmatpush1.msra.mxu0 0.0
    %1287 = vmatprep.subr.mxu0 0.0
    %1288 = vmatpush1.msra.mxu0 0.0
    %1289 = vmatprep.subr.mxu0 0.0
    %1290 = vmatpush1.msra.mxu0 0.0
    %1291 = vmatprep.subr.mxu0 0.0
    %1292 = vmatpush1.msra.mxu0 0.0
    %1293 = vmatprep.subr.mxu0 0.0
    %1294 = vmatpush1.msra.mxu0 0.0
    %1295 = vmatprep.subr.mxu0 0.0
    %1296 = vmatpush1.msra.mxu0 0.0
    %1297 = vmatprep.subr.mxu0 0.0
    %1298 = vmatpush1.msra.mxu0 0.0
    %1299 = vmatprep.subr.mxu0 0.0
    %1300 = vmatpush1.msra.mxu0 0.0
    %1301 = vmatprep.subr.mxu0 0.0
    %1302 = vmatpush1.msra.mxu0 0.0
    %1303 = vmatprep.subr.mxu0 0.0
    %1304 = vmatpush1.msra.mxu0 0.0
    %1305 = vmatprep.subr.mxu0 0.0
    %1306 = vmatpush1.msra.mxu0 0.0
    %1307 = vmatprep.subr.mxu0 0.0
    %1308 = vmatpush1.msra.mxu0 0.0
    %1309 = vmatprep.subr.mxu0 0.0
    %1310 = vmatpush1.msra.mxu0 0.0
    %1311 = vmatprep.subr.mxu0 0.0
    %1312 = vmatpush1.msra.mxu0 0.0
    %1313 = vmatprep.subr.mxu0 0.0
    %1314 = vmatpush1.msra.mxu0 0.0
    %1315 = vmatprep.subr.mxu0 0.0
    %1316 = vmatpush1.msra.mxu0 0.0
    %1317 = vmatprep.mubr.f32.mxu0 0.0
    %1318 = vmatmul.mubr.f32.gmra.mrb[0].mxu0 %v1109
    %v1319 = vpop.f32.mrb[0].mxu0
    %v1320 = vadd.f32 0.0, %v1319
    %v1321 = vpop.f32.mrb[0].mxu0
    %v1322 = vadd.f32 0.0, %v1321
    %1323 = vdwg.mxu0
    %1324 = vmatprep.subr.mxu0 %v740
    %1325 = vmatpush1.msra.mxu0 %v739
    %1326 = vmatprep.subr.mxu0 %v748
    %1327 = vmatpush1.msra.mxu0 %v747
    %1328 = vmatprep.subr.mxu0 %v756
    %1329 = vmatpush1.msra.mxu0 %v755
    %1330 = vmatprep.subr.mxu0 %v764
    %1331 = vmatpush1.msra.mxu0 %v763
    %1332 = vmatprep.subr.mxu0 %v772
    %1333 = vmatpush1.msra.mxu0 %v771
    %1334 = vmatprep.subr.mxu0 %v780
    %1335 = vmatpush1.msra.mxu0 %v779
    %1336 = vmatprep.subr.mxu0 %v788
    %1337 = vmatpush1.msra.mxu0 %v787
    %1338 = vmatprep.subr.mxu0 %v796
    %1339 = vmatpush1.msra.mxu0 %v795
    %1340 = vmatprep.subr.mxu0 0.0
    %1341 = vmatpush1.msra.mxu0 0.0
    %1342 = vmatprep.subr.mxu0 0.0
    %1343 = vmatpush1.msra.mxu0 0.0
    %1344 = vmatprep.subr.mxu0 0.0
    %1345 = vmatpush1.msra.mxu0 0.0
    %1346 = vmatprep.subr.mxu0 0.0
    %1347 = vmatpush1.msra.mxu0 0.0
    %1348 = vmatprep.subr.mxu0 0.0
    %1349 = vmatpush1.msra.mxu0 0.0
    %1350 = vmatprep.subr.mxu0 0.0
    %1351 = vmatpush1.msra.mxu0 0.0
    %1352 = vmatprep.subr.mxu0 0.0
    %1353 = vmatpush1.msra.mxu0 0.0
    %1354 = vmatprep.subr.mxu0 0.0
    %1355 = vmatpush1.msra.mxu0 0.0
    %1356 = vmatprep.subr.mxu0 0.0
    %1357 = vmatpush1.msra.mxu0 0.0
    %1358 = vmatprep.subr.mxu0 0.0
    %1359 = vmatpush1.msra.mxu0 0.0
    %1360 = vmatprep.subr.mxu0 0.0
    %1361 = vmatpush1.msra.mxu0 0.0
    %1362 = vmatprep.subr.mxu0 0.0
    %1363 = vmatpush1.msra.mxu0 0.0
    %1364 = vmatprep.subr.mxu0 0.0
    %1365 = vmatpush1.msra.mxu0 0.0
    %1366 = vmatprep.subr.mxu0 0.0
    %1367 = vmatpush1.msra.mxu0 0.0
    %1368 = vmatprep.subr.mxu0 0.0
    %1369 = vmatpush1.msra.mxu0 0.0
    %1370 = vmatprep.subr.mxu0 0.0
    %1371 = vmatpush1.msra.mxu0 0.0
    %1372 = vmatprep.subr.mxu0 0.0
    %1373 = vmatpush1.msra.mxu0 0.0
    %1374 = vmatprep.subr.mxu0 0.0
    %1375 = vmatpush1.msra.mxu0 0.0
    %1376 = vmatprep.subr.mxu0 0.0
    %1377 = vmatpush1.msra.mxu0 0.0
    %1378 = vmatprep.subr.mxu0 0.0
    %1379 = vmatpush1.msra.mxu0 0.0
    %1380 = vmatprep.subr.mxu0 0.0
    %1381 = vmatpush1.msra.mxu0 0.0
    %1382 = vmatprep.subr.mxu0 0.0
    %1383 = vmatpush1.msra.mxu0 0.0
    %1384 = vmatprep.subr.mxu0 0.0
    %1385 = vmatpush1.msra.mxu0 0.0
    %1386 = vmatprep.subr.mxu0 0.0
    %1387 = vmatpush1.msra.mxu0 0.0
    %1388 = vmatprep.mubr.f32.mxu0 0.0
    %1389 = vmatmul.mubr.f32.gmra.mrb[0].mxu0 %v1109
    %v1390 = vpop.f32.mrb[0].mxu0
    %v1391 = vadd.f32 0.0, %v1390
    %v1392 = vpop.f32.mrb[0].mxu0
    %v1393 = vadd.f32 0.0, %v1392
    %1394 = vdwg.mxu0
    %v1395 = vlaneseq
    %v1396 = vshrl.u32 %v1395, 7
    %v1397 = vsub.s32 0, %v1396
    %v1398 = vrot.slane %v1178, %v1397
    %v1399 = vlaneseq
    %v1400 = vshrl.u32 %v1399, 7
    %v1401 = vsub.s32 0, %v1400
    %v1402 = vrot.slane %v1180, %v1401
    %v1403 = vlaneseq
    %v1404 = vshrl.u32 %v1403, 7
    %v1405 = vsub.s32 0, %v1404
    %v1406 = vrot.slane %v1249, %v1405
    %v1407 = vlaneseq
    %v1408 = vshrl.u32 %v1407, 7
    %v1409 = vsub.s32 0, %v1408
    %v1410 = vrot.slane %v1251, %v1409
    %v1411 = vlaneseq
    %v1412 = vshrl.u32 %v1411, 7
    %v1413 = vsub.s32 0, %v1412
    %v1414 = vrot.slane %v1320, %v1413
    %v1415 = vlaneseq
    %v1416 = vshrl.u32 %v1415, 7
    %v1417 = vsub.s32 0, %v1416
    %v1418 = vrot.slane %v1322, %v1417
    %v1419 = vlaneseq
    %v1420 = vshrl.u32 %v1419, 7
    %v1421 = vsub.s32 0, %v1420
    %v1422 = vrot.slane %v1391, %v1421
    %v1423 = vlaneseq
    %v1424 = vshrl.u32 %v1423, 7
    %v1425 = vsub.s32 0, %v1424
    %v1426 = vrot.slane %v1393, %v1425
    %v1427 = vmul.f32 %v241, %v1398
    %v1428 = vmul.f32 %v243, %v1402
    %v1429 = vmul.f32 %v312, %v1406
    %v1430 = vmul.f32 %v314, %v1410
    %v1431 = vmul.f32 %v383, %v1414
    %v1432 = vmul.f32 %v385, %v1418
    %v1433 = vmul.f32 %v454, %v1422
    %v1434 = vmul.f32 %v456, %v1426
    %v1435 = vlaneseq
    %v1436 = vshrl.u32 %v1435, 7
    %v1437 = vsub.s32 1, %v1436
    %v1438 = vrot.slane %v1178, %v1437
    %v1439 = vlaneseq
    %v1440 = vshrl.u32 %v1439, 7
    %v1441 = vsub.s32 1, %v1440
    %v1442 = vrot.slane %v1180, %v1441
    %v1443 = vlaneseq
    %v1444 = vshrl.u32 %v1443, 7
    %v1445 = vsub.s32 1, %v1444
    %v1446 = vrot.slane %v1249, %v1445
    %v1447 = vlaneseq
    %v1448 = vshrl.u32 %v1447, 7
    %v1449 = vsub.s32 1, %v1448
    %v1450 = vrot.slane %v1251, %v1449
    %v1451 = vlaneseq
    %v1452 = vshrl.u32 %v1451, 7
    %v1453 = vsub.s32 1, %v1452
    %v1454 = vrot.slane %v1320, %v1453
    %v1455 = vlaneseq
    %v1456 = vshrl.u32 %v1455, 7
    %v1457 = vsub.s32 1, %v1456
    %v1458 = vrot.slane %v1322, %v1457
    %v1459 = vlaneseq
    %v1460 = vshrl.u32 %v1459, 7
    %v1461 = vsub.s32 1, %v1460
    %v1462 = vrot.slane %v1391, %v1461
    %v1463 = vlaneseq
    %v1464 = vshrl.u32 %v1463, 7
    %v1465 = vsub.s32 1, %v1464
    %v1466 = vrot.slane %v1393, %v1465
    %v1467 = vadd.f32 %v1427, %v1438
    %v1468 = vadd.f32 %v1428, %v1442
    %v1469 = vadd.f32 %v1429, %v1446
    %v1470 = vadd.f32 %v1430, %v1450
    %v1471 = vadd.f32 %v1431, %v1454
    %v1472 = vadd.f32 %v1432, %v1458
    %v1473 = vadd.f32 %v1433, %v1462
    %v1474 = vadd.f32 %v1434, %v1466
    %vm1475 = vcmp.ge.f32.partialorder %v1467, 0.0
    %vm1476 = vcmp.ge.f32.partialorder %v1468, 0.0
    %vm1477 = vcmp.ge.f32.partialorder %v1469, 0.0
    %vm1478 = vcmp.ge.f32.partialorder %v1470, 0.0
    %vm1479 = vcmp.ge.f32.partialorder %v1471, 0.0
    %vm1480 = vcmp.ge.f32.partialorder %v1472, 0.0
    %vm1481 = vcmp.ge.f32.partialorder %v1473, 0.0
    %vm1482 = vcmp.ge.f32.partialorder %v1474, 0.0
    %v1483 = vmul.f32 %v1467, 0.2
    %v1484 = vmul.f32 %v1468, 0.2
    %v1485 = vmul.f32 %v1469, 0.2
    %v1486 = vmul.f32 %v1470, 0.2
    %v1487 = vmul.f32 %v1471, 0.2
    %v1488 = vmul.f32 %v1472, 0.2
    %v1489 = vmul.f32 %v1473, 0.2
    %v1490 = vmul.f32 %v1474, 0.2
    %v1491 = vsel %vm1475, %v1467, %v1483
    %v1492 = vsel %vm1476, %v1468, %v1484
    %v1493 = vsel %vm1477, %v1469, %v1485
    %v1494 = vsel %vm1478, %v1470, %v1486
    %v1495 = vsel %vm1479, %v1471, %v1487
    %v1496 = vsel %vm1480, %v1472, %v1488
    %v1497 = vsel %vm1481, %v1473, %v1489
    %v1498 = vsel %vm1482, %v1474, %v1490
    %v1507 = vcombine.low %v1491, %v1492
    %v1508 = vcombine.low %v1493, %v1494
    %v1510 = vunpack.c.l.s4 1983009808
    %v1511 = vunpack.c.0.s8 %v1510
    %v1512 = vlaneseq
    %v1513 = vshrl.u32 %v1512, 7
    %v1514 = vsub.s32 %v1511, %v1513
    %v1515 = vrot.slane %v1507, %v1514
    %v1517 = vunpack.c.l.s4 1983009808
    %v1518 = vunpack.c.0.s8 %v1517
    %v1519 = vlaneseq
    %v1520 = vshrl.u32 %v1519, 7
    %v1521 = vsub.s32 %v1518, %v1520
    %v1522 = vrot.slane %v1508, %v1521
    %v1523 = vcombine.low %v1515, %v1522
    %v1524 = vcombine.low %v1495, %v1496
    %v1525 = vcombine.low %v1497, %v1498
    %v1527 = vunpack.c.l.s4 1983009808
    %v1528 = vunpack.c.0.s8 %v1527
    %v1529 = vlaneseq
    %v1530 = vshrl.u32 %v1529, 7
    %v1531 = vsub.s32 %v1528, %v1530
    %v1532 = vrot.slane %v1524, %v1531
    %v1534 = vunpack.c.l.s4 1983009808
    %v1535 = vunpack.c.0.s8 %v1534
    %v1536 = vlaneseq
    %v1537 = vshrl.u32 %v1536, 7
    %v1538 = vsub.s32 %v1535, %v1537
    %v1539 = vrot.slane %v1525, %v1538
    %v1540 = vcombine.low %v1532, %v1539
    %1543 = vst [vmem:[#allocation2] sm:$0xff] %v1523
    %1544 = vst [vmem:[#allocation2 + $0x8] sm:$0xff] %v1540
    %v1545 = vld [vmem:[%s3] sm:$0xf]
    %v1546 = vld [vmem:[%s3 + $0x4] sm:$0xf]
    %v1547 = vld [vmem:[%s3 + $0x8] sm:$0xf]
    %v1548 = vld [vmem:[%s3 + $0xc] sm:$0xf]
    %v1549 = vld [vmem:[%s3 + $0x10] sm:$0xf]
    %v1550 = vld [vmem:[%s3 + $0x14] sm:$0xf]
    %v1551 = vld [vmem:[%s3 + $0x18] sm:$0xf]
    %v1552 = vld [vmem:[%s3 + $0x1c] sm:$0xf]
    %v1553 = vld [vmem:[%s3 + $0x20] sm:$0xf]
    %v1554 = vld [vmem:[%s3 + $0x24] sm:$0xf]
    %v1555 = vld [vmem:[%s3 + $0x28] sm:$0xf]
    %v1556 = vld [vmem:[%s3 + $0x2c] sm:$0xf]
    %v1557 = vld [vmem:[%s3 + $0x30] sm:$0xf]
    %v1558 = vld [vmem:[%s3 + $0x34] sm:$0xf]
    %v1559 = vld [vmem:[%s3 + $0x38] sm:$0xf]
    %v1560 = vld [vmem:[%s3 + $0x3c] sm:$0xf]
    %v1561 = vld [vmem:[%s3 + $0x40] sm:$0xf]
    %v1562 = vld [vmem:[%s3 + $0x44] sm:$0xf]
    %v1563 = vld [vmem:[%s3 + $0x48] sm:$0xf]
    %v1564 = vld [vmem:[%s3 + $0x4c] sm:$0xf]
    %v1565 = vld [vmem:[%s3 + $0x50] sm:$0xf]
    %v1566 = vld [vmem:[%s3 + $0x54] sm:$0xf]
    %v1567 = vld [vmem:[%s3 + $0x58] sm:$0xf]
    %v1568 = vld [vmem:[%s3 + $0x5c] sm:$0xf]
    %v1569 = vld [vmem:[%s3 + $0x60] sm:$0xf]
    %v1570 = vld [vmem:[%s3 + $0x64] sm:$0xf]
    %v1571 = vld [vmem:[%s3 + $0x68] sm:$0xf]
    %v1572 = vld [vmem:[%s3 + $0x6c] sm:$0xf]
    %v1573 = vld [vmem:[%s3 + $0x70] sm:$0xf]
    %v1574 = vld [vmem:[%s3 + $0x74] sm:$0xf]
    %v1575 = vld [vmem:[%s3 + $0x78] sm:$0xf]
    %v1576 = vld [vmem:[%s3 + $0x7c] sm:$0xf]
    %v1577 = vld [vmem:[%s3 + $0x80] sm:$0xf]
    %v1578 = vld [vmem:[%s3 + $0x84] sm:$0xf]
    %v1579 = vld [vmem:[%s3 + $0x88] sm:$0xf]
    %v1580 = vld [vmem:[%s3 + $0x8c] sm:$0xf]
    %v1581 = vld [vmem:[%s3 + $0x90] sm:$0xf]
    %v1582 = vld [vmem:[%s3 + $0x94] sm:$0xf]
    %v1583 = vld [vmem:[%s3 + $0x98] sm:$0xf]
    %v1584 = vld [vmem:[%s3 + $0x9c] sm:$0xf]
    %v1585 = vld [vmem:[%s3 + $0xa0] sm:$0xf]
    %v1586 = vld [vmem:[%s3 + $0xa4] sm:$0xf]
    %v1587 = vld [vmem:[%s3 + $0xa8] sm:$0xf]
    %v1588 = vld [vmem:[%s3 + $0xac] sm:$0xf]
    %v1589 = vld [vmem:[%s3 + $0xb0] sm:$0xf]
    %v1590 = vld [vmem:[%s3 + $0xb4] sm:$0xf]
    %v1591 = vld [vmem:[%s3 + $0xb8] sm:$0xf]
    %v1592 = vld [vmem:[%s3 + $0xbc] sm:$0xf]
    %v1593 = vld [vmem:[%s3 + $0xc0] sm:$0xf]
    %v1594 = vld [vmem:[%s3 + $0xc4] sm:$0xf]
    %v1595 = vld [vmem:[%s3 + $0xc8] sm:$0xf]
    %v1596 = vld [vmem:[%s3 + $0xcc] sm:$0xf]
    %v1597 = vld [vmem:[%s3 + $0xd0] sm:$0xf]
    %v1598 = vld [vmem:[%s3 + $0xd4] sm:$0xf]
    %v1599 = vld [vmem:[%s3 + $0xd8] sm:$0xf]
    %v1600 = vld [vmem:[%s3 + $0xdc] sm:$0xf]
    %v1601 = vld [vmem:[%s3 + $0xe0] sm:$0xf]
    %v1602 = vld [vmem:[%s3 + $0xe4] sm:$0xf]
    %v1603 = vld [vmem:[%s3 + $0xe8] sm:$0xf]
    %v1604 = vld [vmem:[%s3 + $0xec] sm:$0xf]
    %v1605 = vld [vmem:[%s3 + $0xf0] sm:$0xf]
    %v1606 = vld [vmem:[%s3 + $0xf4] sm:$0xf]
    %v1607 = vld [vmem:[%s3 + $0xf8] sm:$0xf]
    %v1608 = vld [vmem:[%s3 + $0xfc] sm:$0xf]
    %v1609 = vld [vmem:[%s3 + $0x100] sm:$0xf]
    %v1610 = vld [vmem:[%s3 + $0x104] sm:$0xf]
    %v1611 = vld [vmem:[%s3 + $0x108] sm:$0xf]
    %v1612 = vld [vmem:[%s3 + $0x10c] sm:$0xf]
    %v1613 = vld [vmem:[%s3 + $0x110] sm:$0xf]
    %v1614 = vld [vmem:[%s3 + $0x114] sm:$0xf]
    %v1615 = vld [vmem:[%s3 + $0x118] sm:$0xf]
    %v1616 = vld [vmem:[%s3 + $0x11c] sm:$0xf]
    %v1617 = vld [vmem:[%s3 + $0x120] sm:$0xf]
    %v1618 = vld [vmem:[%s3 + $0x124] sm:$0xf]
    %v1619 = vld [vmem:[%s3 + $0x128] sm:$0xf]
    %v1620 = vld [vmem:[%s3 + $0x12c] sm:$0xf]
    %v1621 = vld [vmem:[%s3 + $0x130] sm:$0xf]
    %v1622 = vld [vmem:[%s3 + $0x134] sm:$0xf]
    %v1623 = vld [vmem:[%s3 + $0x138] sm:$0xf]
    %v1624 = vld [vmem:[%s3 + $0x13c] sm:$0xf]
    %v1625 = vld [vmem:[%s3 + $0x140] sm:$0xf]
    %v1626 = vld [vmem:[%s3 + $0x144] sm:$0xf]
    %v1627 = vld [vmem:[%s3 + $0x148] sm:$0xf]
    %v1628 = vld [vmem:[%s3 + $0x14c] sm:$0xf]
    %v1629 = vld [vmem:[%s3 + $0x150] sm:$0xf]
    %v1630 = vld [vmem:[%s3 + $0x154] sm:$0xf]
    %v1631 = vld [vmem:[%s3 + $0x158] sm:$0xf]
    %v1632 = vld [vmem:[%s3 + $0x15c] sm:$0xf]
    %v1633 = vld [vmem:[%s3 + $0x160] sm:$0xf]
    %v1634 = vld [vmem:[%s3 + $0x164] sm:$0xf]
    %v1635 = vld [vmem:[%s3 + $0x168] sm:$0xf]
    %v1636 = vld [vmem:[%s3 + $0x16c] sm:$0xf]
    %v1637 = vld [vmem:[%s3 + $0x170] sm:$0xf]
    %v1638 = vld [vmem:[%s3 + $0x174] sm:$0xf]
    %v1639 = vld [vmem:[%s3 + $0x178] sm:$0xf]
    %v1640 = vld [vmem:[%s3 + $0x17c] sm:$0xf]
    %v1641 = vld [vmem:[%s3 + $0x180] sm:$0xf]
    %v1642 = vld [vmem:[%s3 + $0x184] sm:$0xf]
    %v1643 = vld [vmem:[%s3 + $0x188] sm:$0xf]
    %v1644 = vld [vmem:[%s3 + $0x18c] sm:$0xf]
    %v1645 = vld [vmem:[%s3 + $0x190] sm:$0xf]
    %v1646 = vld [vmem:[%s3 + $0x194] sm:$0xf]
    %v1647 = vld [vmem:[%s3 + $0x198] sm:$0xf]
    %v1648 = vld [vmem:[%s3 + $0x19c] sm:$0xf]
    %v1649 = vld [vmem:[%s3 + $0x1a0] sm:$0xf]
    %v1650 = vld [vmem:[%s3 + $0x1a4] sm:$0xf]
    %v1651 = vld [vmem:[%s3 + $0x1a8] sm:$0xf]
    %v1652 = vld [vmem:[%s3 + $0x1ac] sm:$0xf]
    %v1653 = vld [vmem:[%s3 + $0x1b0] sm:$0xf]
    %v1654 = vld [vmem:[%s3 + $0x1b4] sm:$0xf]
    %v1655 = vld [vmem:[%s3 + $0x1b8] sm:$0xf]
    %v1656 = vld [vmem:[%s3 + $0x1bc] sm:$0xf]
    %v1657 = vld [vmem:[%s3 + $0x1c0] sm:$0xf]
    %v1658 = vld [vmem:[%s3 + $0x1c4] sm:$0xf]
    %v1659 = vld [vmem:[%s3 + $0x1c8] sm:$0xf]
    %v1660 = vld [vmem:[%s3 + $0x1cc] sm:$0xf]
    %v1661 = vld [vmem:[%s3 + $0x1d0] sm:$0xf]
    %v1662 = vld [vmem:[%s3 + $0x1d4] sm:$0xf]
    %v1663 = vld [vmem:[%s3 + $0x1d8] sm:$0xf]
    %v1664 = vld [vmem:[%s3 + $0x1dc] sm:$0xf]
    %v1665 = vld [vmem:[%s3 + $0x1e0] sm:$0xf]
    %v1666 = vld [vmem:[%s3 + $0x1e4] sm:$0xf]
    %v1667 = vld [vmem:[%s3 + $0x1e8] sm:$0xf]
    %v1668 = vld [vmem:[%s3 + $0x1ec] sm:$0xf]
    %v1669 = vld [vmem:[%s3 + $0x1f0] sm:$0xf]
    %v1670 = vld [vmem:[%s3 + $0x1f4] sm:$0xf]
    %v1671 = vld [vmem:[%s3 + $0x1f8] sm:$0xf]
    %v1672 = vld [vmem:[%s3 + $0x1fc] sm:$0xf]
    %v1673 = vunpack.c.l.bf16 %v1545
    %v1674 = vunpack.c.l.bf16 %v1546
    %v1675 = vunpack.c.l.bf16 %v1547
    %v1676 = vunpack.c.l.bf16 %v1548
    %v1677 = vunpack.c.l.bf16 %v1549
    %v1678 = vunpack.c.l.bf16 %v1550
    %v1679 = vunpack.c.l.bf16 %v1551
    %v1680 = vunpack.c.l.bf16 %v1552
    %v1681 = vunpack.c.l.bf16 %v1553
    %v1682 = vunpack.c.l.bf16 %v1554
    %v1683 = vunpack.c.l.bf16 %v1555
    %v1684 = vunpack.c.l.bf16 %v1556
    %v1685 = vunpack.c.l.bf16 %v1557
    %v1686 = vunpack.c.l.bf16 %v1558
    %v1687 = vunpack.c.l.bf16 %v1559
    %v1688 = vunpack.c.l.bf16 %v1560
    %v1689 = vunpack.c.l.bf16 %v1561
    %v1690 = vunpack.c.l.bf16 %v1562
    %v1691 = vunpack.c.l.bf16 %v1563
    %v1692 = vunpack.c.l.bf16 %v1564
    %v1693 = vunpack.c.l.bf16 %v1565
    %v1694 = vunpack.c.l.bf16 %v1566
    %v1695 = vunpack.c.l.bf16 %v1567
    %v1696 = vunpack.c.l.bf16 %v1568
    %v1697 = vunpack.c.l.bf16 %v1569
    %v1698 = vunpack.c.l.bf16 %v1570
    %v1699 = vunpack.c.l.bf16 %v1571
    %v1700 = vunpack.c.l.bf16 %v1572
    %v1701 = vunpack.c.l.bf16 %v1573
    %v1702 = vunpack.c.l.bf16 %v1574
    %v1703 = vunpack.c.l.bf16 %v1575
    %v1704 = vunpack.c.l.bf16 %v1576
    %v1705 = vunpack.c.l.bf16 %v1577
    %v1706 = vunpack.c.l.bf16 %v1578
    %v1707 = vunpack.c.l.bf16 %v1579
    %v1708 = vunpack.c.l.bf16 %v1580
    %v1709 = vunpack.c.l.bf16 %v1581
    %v1710 = vunpack.c.l.bf16 %v1582
    %v1711 = vunpack.c.l.bf16 %v1583
    %v1712 = vunpack.c.l.bf16 %v1584
    %v1713 = vunpack.c.l.bf16 %v1585
    %v1714 = vunpack.c.l.bf16 %v1586
    %v1715 = vunpack.c.l.bf16 %v1587
    %v1716 = vunpack.c.l.bf16 %v1588
    %v1717 = vunpack.c.l.bf16 %v1589
    %v1718 = vunpack.c.l.bf16 %v1590
    %v1719 = vunpack.c.l.bf16 %v1591
    %v1720 = vunpack.c.l.bf16 %v1592
    %v1721 = vunpack.c.l.bf16 %v1593
    %v1722 = vunpack.c.l.bf16 %v1594
    %v1723 = vunpack.c.l.bf16 %v1595
    %v1724 = vunpack.c.l.bf16 %v1596
    %v1725 = vunpack.c.l.bf16 %v1597
    %v1726 = vunpack.c.l.bf16 %v1598
    %v1727 = vunpack.c.l.bf16 %v1599
    %v1728 = vunpack.c.l.bf16 %v1600
    %v1729 = vunpack.c.l.bf16 %v1601
    %v1730 = vunpack.c.l.bf16 %v1602
    %v1731 = vunpack.c.l.bf16 %v1603
    %v1732 = vunpack.c.l.bf16 %v1604
    %v1733 = vunpack.c.l.bf16 %v1605
    %v1734 = vunpack.c.l.bf16 %v1606
    %v1735 = vunpack.c.l.bf16 %v1607
    %v1736 = vunpack.c.l.bf16 %v1608
    %v1737 = vunpack.c.l.bf16 %v1609
    %v1738 = vunpack.c.l.bf16 %v1610
    %v1739 = vunpack.c.l.bf16 %v1611
    %v1740 = vunpack.c.l.bf16 %v1612
    %v1741 = vunpack.c.l.bf16 %v1613
    %v1742 = vunpack.c.l.bf16 %v1614
    %v1743 = vunpack.c.l.bf16 %v1615
    %v1744 = vunpack.c.l.bf16 %v1616
    %v1745 = vunpack.c.l.bf16 %v1617
    %v1746 = vunpack.c.l.bf16 %v1618
    %v1747 = vunpack.c.l.bf16 %v1619
    %v1748 = vunpack.c.l.bf16 %v1620
    %v1749 = vunpack.c.l.bf16 %v1621
    %v1750 = vunpack.c.l.bf16 %v1622
    %v1751 = vunpack.c.l.bf16 %v1623
    %v1752 = vunpack.c.l.bf16 %v1624
    %v1753 = vunpack.c.l.bf16 %v1625
    %v1754 = vunpack.c.l.bf16 %v1626
    %v1755 = vunpack.c.l.bf16 %v1627
    %v1756 = vunpack.c.l.bf16 %v1628
    %v1757 = vunpack.c.l.bf16 %v1629
    %v1758 = vunpack.c.l.bf16 %v1630
    %v1759 = vunpack.c.l.bf16 %v1631
    %v1760 = vunpack.c.l.bf16 %v1632
    %v1761 = vunpack.c.l.bf16 %v1633
    %v1762 = vunpack.c.l.bf16 %v1634
    %v1763 = vunpack.c.l.bf16 %v1635
    %v1764 = vunpack.c.l.bf16 %v1636
    %v1765 = vunpack.c.l.bf16 %v1637
    %v1766 = vunpack.c.l.bf16 %v1638
    %v1767 = vunpack.c.l.bf16 %v1639
    %v1768 = vunpack.c.l.bf16 %v1640
    %v1769 = vunpack.c.l.bf16 %v1641
    %v1770 = vunpack.c.l.bf16 %v1642
    %v1771 = vunpack.c.l.bf16 %v1643
    %v1772 = vunpack.c.l.bf16 %v1644
    %v1773 = vunpack.c.l.bf16 %v1645
    %v1774 = vunpack.c.l.bf16 %v1646
    %v1775 = vunpack.c.l.bf16 %v1647
    %v1776 = vunpack.c.l.bf16 %v1648
    %v1777 = vunpack.c.l.bf16 %v1649
    %v1778 = vunpack.c.l.bf16 %v1650
    %v1779 = vunpack.c.l.bf16 %v1651
    %v1780 = vunpack.c.l.bf16 %v1652
    %v1781 = vunpack.c.l.bf16 %v1653
    %v1782 = vunpack.c.l.bf16 %v1654
    %v1783 = vunpack.c.l.bf16 %v1655
    %v1784 = vunpack.c.l.bf16 %v1656
    %v1785 = vunpack.c.l.bf16 %v1657
    %v1786 = vunpack.c.l.bf16 %v1658
    %v1787 = vunpack.c.l.bf16 %v1659
    %v1788 = vunpack.c.l.bf16 %v1660
    %v1789 = vunpack.c.l.bf16 %v1661
    %v1790 = vunpack.c.l.bf16 %v1662
    %v1791 = vunpack.c.l.bf16 %v1663
    %v1792 = vunpack.c.l.bf16 %v1664
    %v1793 = vunpack.c.l.bf16 %v1665
    %v1794 = vunpack.c.l.bf16 %v1666
    %v1795 = vunpack.c.l.bf16 %v1667
    %v1796 = vunpack.c.l.bf16 %v1668
    %v1797 = vunpack.c.l.bf16 %v1669
    %v1798 = vunpack.c.l.bf16 %v1670
    %v1799 = vunpack.c.l.bf16 %v1671
    %v1800 = vunpack.c.l.bf16 %v1672
    %v1801 = vld [vmem:[%s4] sm:$0x1]
    %v1803 = vlaneseq
    %v1804 = vshrl.u32 %v1803, 7
    %v1805 = vsub.s32 0, %v1804
    %v1806 = vrot.slane %v1801, %v1805
    %1808 = vmatprep.subr.mxu0 0.0
    %1809 = vmatpush1.msra.mxu0 %v1673
    %1810 = vmatprep.subr.mxu0 0.0
    %1811 = vmatpush1.msra.mxu0 %v1674
    %1812 = vmatprep.subr.mxu0 0.0
    %1813 = vmatpush1.msra.mxu0 %v1675
    %1814 = vmatprep.subr.mxu0 0.0
    %1815 = vmatpush1.msra.mxu0 %v1676
    %1816 = vmatprep.subr.mxu0 0.0
    %1817 = vmatpush1.msra.mxu0 %v1677
    %1818 = vmatprep.subr.mxu0 0.0
    %1819 = vmatpush1.msra.mxu0 %v1678
    %1820 = vmatprep.subr.mxu0 0.0
    %1821 = vmatpush1.msra.mxu0 %v1679
    %1822 = vmatprep.subr.mxu0 0.0
    %1823 = vmatpush1.msra.mxu0 %v1680
    %1824 = vmatprep.subr.mxu0 0.0
    %1825 = vmatpush1.msra.mxu0 %v1681
    %1826 = vmatprep.subr.mxu0 0.0
    %1827 = vmatpush1.msra.mxu0 %v1682
    %1828 = vmatprep.subr.mxu0 0.0
    %1829 = vmatpush1.msra.mxu0 %v1683
    %1830 = vmatprep.subr.mxu0 0.0
    %1831 = vmatpush1.msra.mxu0 %v1684
    %1832 = vmatprep.subr.mxu0 0.0
    %1833 = vmatpush1.msra.mxu0 %v1685
    %1834 = vmatprep.subr.mxu0 0.0
    %1835 = vmatpush1.msra.mxu0 %v1686
    %1836 = vmatprep.subr.mxu0 0.0
    %1837 = vmatpush1.msra.mxu0 %v1687
    %1838 = vmatprep.subr.mxu0 0.0
    %1839 = vmatpush1.msra.mxu0 %v1688
    %1840 = vmatprep.subr.mxu0 0.0
    %1841 = vmatpush1.msra.mxu0 %v1689
    %1842 = vmatprep.subr.mxu0 0.0
    %1843 = vmatpush1.msra.mxu0 %v1690
    %1844 = vmatprep.subr.mxu0 0.0
    %1845 = vmatpush1.msra.mxu0 %v1691
    %1846 = vmatprep.subr.mxu0 0.0
    %1847 = vmatpush1.msra.mxu0 %v1692
    %1848 = vmatprep.subr.mxu0 0.0
    %1849 = vmatpush1.msra.mxu0 %v1693
    %1850 = vmatprep.subr.mxu0 0.0
    %1851 = vmatpush1.msra.mxu0 %v1694
    %1852 = vmatprep.subr.mxu0 0.0
    %1853 = vmatpush1.msra.mxu0 %v1695
    %1854 = vmatprep.subr.mxu0 0.0
    %1855 = vmatpush1.msra.mxu0 %v1696
    %1856 = vmatprep.subr.mxu0 0.0
    %1857 = vmatpush1.msra.mxu0 %v1697
    %1858 = vmatprep.subr.mxu0 0.0
    %1859 = vmatpush1.msra.mxu0 %v1698
    %1860 = vmatprep.subr.mxu0 0.0
    %1861 = vmatpush1.msra.mxu0 %v1699
    %1862 = vmatprep.subr.mxu0 0.0
    %1863 = vmatpush1.msra.mxu0 %v1700
    %1864 = vmatprep.subr.mxu0 0.0
    %1865 = vmatpush1.msra.mxu0 %v1701
    %1866 = vmatprep.subr.mxu0 0.0
    %1867 = vmatpush1.msra.mxu0 %v1702
    %1868 = vmatprep.subr.mxu0 0.0
    %1869 = vmatpush1.msra.mxu0 %v1703
    %1870 = vmatprep.subr.mxu0 0.0
    %1871 = vmatpush1.msra.mxu0 %v1704
    %1872 = vmatprep.mubr.f32.mxu0 %v1492
    %1873 = vmatmul.mubr.f32.gmra.mrb[0].mxu0 %v1491
    %v1874 = vpop.f32.mrb[0].mxu0
    %v1875 = vadd.f32 %v1806, %v1874
    %v1876 = vpop.f32.mrb[0].mxu0
    %1877 = vdwg.mxu0
    %1878 = vmatprep.subr.mxu0 0.0
    %1879 = vmatpush1.msra.mxu0 %v1705
    %1880 = vmatprep.subr.mxu0 0.0
    %1881 = vmatpush1.msra.mxu0 %v1706
    %1882 = vmatprep.subr.mxu0 0.0
    %1883 = vmatpush1.msra.mxu0 %v1707
    %1884 = vmatprep.subr.mxu0 0.0
    %1885 = vmatpush1.msra.mxu0 %v1708
    %1886 = vmatprep.subr.mxu0 0.0
    %1887 = vmatpush1.msra.mxu0 %v1709
    %1888 = vmatprep.subr.mxu0 0.0
    %1889 = vmatpush1.msra.mxu0 %v1710
    %1890 = vmatprep.subr.mxu0 0.0
    %1891 = vmatpush1.msra.mxu0 %v1711
    %1892 = vmatprep.subr.mxu0 0.0
    %1893 = vmatpush1.msra.mxu0 %v1712
    %1894 = vmatprep.subr.mxu0 0.0
    %1895 = vmatpush1.msra.mxu0 %v1713
    %1896 = vmatprep.subr.mxu0 0.0
    %1897 = vmatpush1.msra.mxu0 %v1714
    %1898 = vmatprep.subr.mxu0 0.0
    %1899 = vmatpush1.msra.mxu0 %v1715
    %1900 = vmatprep.subr.mxu0 0.0
    %1901 = vmatpush1.msra.mxu0 %v1716
    %1902 = vmatprep.subr.mxu0 0.0
    %1903 = vmatpush1.msra.mxu0 %v1717
    %1904 = vmatprep.subr.mxu0 0.0
    %1905 = vmatpush1.msra.mxu0 %v1718
    %1906 = vmatprep.subr.mxu0 0.0
    %1907 = vmatpush1.msra.mxu0 %v1719
    %1908 = vmatprep.subr.mxu0 0.0
    %1909 = vmatpush1.msra.mxu0 %v1720
    %1910 = vmatprep.subr.mxu0 0.0
    %1911 = vmatpush1.msra.mxu0 %v1721
    %1912 = vmatprep.subr.mxu0 0.0
    %1913 = vmatpush1.msra.mxu0 %v1722
    %1914 = vmatprep.subr.mxu0 0.0
    %1915 = vmatpush1.msra.mxu0 %v1723
    %1916 = vmatprep.subr.mxu0 0.0
    %1917 = vmatpush1.msra.mxu0 %v1724
    %1918 = vmatprep.subr.mxu0 0.0
    %1919 = vmatpush1.msra.mxu0 %v1725
    %1920 = vmatprep.subr.mxu0 0.0
    %1921 = vmatpush1.msra.mxu0 %v1726
    %1922 = vmatprep.subr.mxu0 0.0
    %1923 = vmatpush1.msra.mxu0 %v1727
    %1924 = vmatprep.subr.mxu0 0.0
    %1925 = vmatpush1.msra.mxu0 %v1728
    %1926 = vmatprep.subr.mxu0 0.0
    %1927 = vmatpush1.msra.mxu0 %v1729
    %1928 = vmatprep.subr.mxu0 0.0
    %1929 = vmatpush1.msra.mxu0 %v1730
    %1930 = vmatprep.subr.mxu0 0.0
    %1931 = vmatpush1.msra.mxu0 %v1731
    %1932 = vmatprep.subr.mxu0 0.0
    %1933 = vmatpush1.msra.mxu0 %v1732
    %1934 = vmatprep.subr.mxu0 0.0
    %1935 = vmatpush1.msra.mxu0 %v1733
    %1936 = vmatprep.subr.mxu0 0.0
    %1937 = vmatpush1.msra.mxu0 %v1734
    %1938 = vmatprep.subr.mxu0 0.0
    %1939 = vmatpush1.msra.mxu0 %v1735
    %1940 = vmatprep.subr.mxu0 0.0
    %1941 = vmatpush1.msra.mxu0 %v1736
    %1942 = vmatprep.mubr.f32.mxu0 %v1494
    %1943 = vmatmul.mubr.f32.gmra.mrb[0].mxu0 %v1493
    %v1944 = vpop.f32.mrb[0].mxu0
    %v1945 = vadd.f32 %v1875, %v1944
    %v1946 = vpop.f32.mrb[0].mxu0
    %1947 = vdwg.mxu0
    %1948 = vmatprep.subr.mxu0 0.0
    %1949 = vmatpush1.msra.mxu0 %v1737
    %1950 = vmatprep.subr.mxu0 0.0
    %1951 = vmatpush1.msra.mxu0 %v1738
    %1952 = vmatprep.subr.mxu0 0.0
    %1953 = vmatpush1.msra.mxu0 %v1739
    %1954 = vmatprep.subr.mxu0 0.0
    %1955 = vmatpush1.msra.mxu0 %v1740
    %1956 = vmatprep.subr.mxu0 0.0
    %1957 = vmatpush1.msra.mxu0 %v1741
    %1958 = vmatprep.subr.mxu0 0.0
    %1959 = vmatpush1.msra.mxu0 %v1742
    %1960 = vmatprep.subr.mxu0 0.0
    %1961 = vmatpush1.msra.mxu0 %v1743
    %1962 = vmatprep.subr.mxu0 0.0
    %1963 = vmatpush1.msra.mxu0 %v1744
    %1964 = vmatprep.subr.mxu0 0.0
    %1965 = vmatpush1.msra.mxu0 %v1745
    %1966 = vmatprep.subr.mxu0 0.0
    %1967 = vmatpush1.msra.mxu0 %v1746
    %1968 = vmatprep.subr.mxu0 0.0
    %1969 = vmatpush1.msra.mxu0 %v1747
    %1970 = vmatprep.subr.mxu0 0.0
    %1971 = vmatpush1.msra.mxu0 %v1748
    %1972 = vmatprep.subr.mxu0 0.0
    %1973 = vmatpush1.msra.mxu0 %v1749
    %1974 = vmatprep.subr.mxu0 0.0
    %1975 = vmatpush1.msra.mxu0 %v1750
    %1976 = vmatprep.subr.mxu0 0.0
    %1977 = vmatpush1.msra.mxu0 %v1751
    %1978 = vmatprep.subr.mxu0 0.0
    %1979 = vmatpush1.msra.mxu0 %v1752
    %1980 = vmatprep.subr.mxu0 0.0
    %1981 = vmatpush1.msra.mxu0 %v1753
    %1982 = vmatprep.subr.mxu0 0.0
    %1983 = vmatpush1.msra.mxu0 %v1754
    %1984 = vmatprep.subr.mxu0 0.0
    %1985 = vmatpush1.msra.mxu0 %v1755
    %1986 = vmatprep.subr.mxu0 0.0
    %1987 = vmatpush1.msra.mxu0 %v1756
    %1988 = vmatprep.subr.mxu0 0.0
    %1989 = vmatpush1.msra.mxu0 %v1757
    %1990 = vmatprep.subr.mxu0 0.0
    %1991 = vmatpush1.msra.mxu0 %v1758
    %1992 = vmatprep.subr.mxu0 0.0
    %1993 = vmatpush1.msra.mxu0 %v1759
    %1994 = vmatprep.subr.mxu0 0.0
    %1995 = vmatpush1.msra.mxu0 %v1760
    %1996 = vmatprep.subr.mxu0 0.0
    %1997 = vmatpush1.msra.mxu0 %v1761
    %1998 = vmatprep.subr.mxu0 0.0
    %1999 = vmatpush1.msra.mxu0 %v1762
    %2000 = vmatprep.subr.mxu0 0.0
    %2001 = vmatpush1.msra.mxu0 %v1763
    %2002 = vmatprep.subr.mxu0 0.0
    %2003 = vmatpush1.msra.mxu0 %v1764
    %2004 = vmatprep.subr.mxu0 0.0
    %2005 = vmatpush1.msra.mxu0 %v1765
    %2006 = vmatprep.subr.mxu0 0.0
    %2007 = vmatpush1.msra.mxu0 %v1766
    %2008 = vmatprep.subr.mxu0 0.0
    %2009 = vmatpush1.msra.mxu0 %v1767
    %2010 = vmatprep.subr.mxu0 0.0
    %2011 = vmatpush1.msra.mxu0 %v1768
    %2012 = vmatprep.mubr.f32.mxu0 %v1496
    %2013 = vmatmul.mubr.f32.gmra.mrb[0].mxu0 %v1495
    %v2014 = vpop.f32.mrb[0].mxu0
    %v2015 = vadd.f32 %v1945, %v2014
    %v2016 = vpop.f32.mrb[0].mxu0
    %2017 = vdwg.mxu0
    %2018 = vmatprep.subr.mxu0 0.0
    %2019 = vmatpush1.msra.mxu0 %v1769
    %2020 = vmatprep.subr.mxu0 0.0
    %2021 = vmatpush1.msra.mxu0 %v1770
    %2022 = vmatprep.subr.mxu0 0.0
    %2023 = vmatpush1.msra.mxu0 %v1771
    %2024 = vmatprep.subr.mxu0 0.0
    %2025 = vmatpush1.msra.mxu0 %v1772
    %2026 = vmatprep.subr.mxu0 0.0
    %2027 = vmatpush1.msra.mxu0 %v1773
    %2028 = vmatprep.subr.mxu0 0.0
    %2029 = vmatpush1.msra.mxu0 %v1774
    %2030 = vmatprep.subr.mxu0 0.0
    %2031 = vmatpush1.msra.mxu0 %v1775
    %2032 = vmatprep.subr.mxu0 0.0
    %2033 = vmatpush1.msra.mxu0 %v1776
    %2034 = vmatprep.subr.mxu0 0.0
    %2035 = vmatpush1.msra.mxu0 %v1777
    %2036 = vmatprep.subr.mxu0 0.0
    %2037 = vmatpush1.msra.mxu0 %v1778
    %2038 = vmatprep.subr.mxu0 0.0
    %2039 = vmatpush1.msra.mxu0 %v1779
    %2040 = vmatprep.subr.mxu0 0.0
    %2041 = vmatpush1.msra.mxu0 %v1780
    %2042 = vmatprep.subr.mxu0 0.0
    %2043 = vmatpush1.msra.mxu0 %v1781
    %2044 = vmatprep.subr.mxu0 0.0
    %2045 = vmatpush1.msra.mxu0 %v1782
    %2046 = vmatprep.subr.mxu0 0.0
    %2047 = vmatpush1.msra.mxu0 %v1783
    %2048 = vmatprep.subr.mxu0 0.0
    %2049 = vmatpush1.msra.mxu0 %v1784
    %2050 = vmatprep.subr.mxu0 0.0
    %2051 = vmatpush1.msra.mxu0 %v1785
    %2052 = vmatprep.subr.mxu0 0.0
    %2053 = vmatpush1.msra.mxu0 %v1786
    %2054 = vmatprep.subr.mxu0 0.0
    %2055 = vmatpush1.msra.mxu0 %v1787
    %2056 = vmatprep.subr.mxu0 0.0
    %2057 = vmatpush1.msra.mxu0 %v1788
    %2058 = vmatprep.subr.mxu0 0.0
    %2059 = vmatpush1.msra.mxu0 %v1789
    %2060 = vmatprep.subr.mxu0 0.0
    %2061 = vmatpush1.msra.mxu0 %v1790
    %2062 = vmatprep.subr.mxu0 0.0
    %2063 = vmatpush1.msra.mxu0 %v1791
    %2064 = vmatprep.subr.mxu0 0.0
    %2065 = vmatpush1.msra.mxu0 %v1792
    %2066 = vmatprep.subr.mxu0 0.0
    %2067 = vmatpush1.msra.mxu0 %v1793
    %2068 = vmatprep.subr.mxu0 0.0
    %2069 = vmatpush1.msra.mxu0 %v1794
    %2070 = vmatprep.subr.mxu0 0.0
    %2071 = vmatpush1.msra.mxu0 %v1795
    %2072 = vmatprep.subr.mxu0 0.0
    %2073 = vmatpush1.msra.mxu0 %v1796
    %2074 = vmatprep.subr.mxu0 0.0
    %2075 = vmatpush1.msra.mxu0 %v1797
    %2076 = vmatprep.subr.mxu0 0.0
    %2077 = vmatpush1.msra.mxu0 %v1798
    %2078 = vmatprep.subr.mxu0 0.0
    %2079 = vmatpush1.msra.mxu0 %v1799
    %2080 = vmatprep.subr.mxu0 0.0
    %2081 = vmatpush1.msra.mxu0 %v1800
    %2082 = vmatprep.mubr.f32.mxu0 %v1498
    %2083 = vmatmul.mubr.f32.gmra.mrb[0].mxu0 %v1497
    %v2084 = vpop.f32.mrb[0].mxu0
    %v2085 = vadd.f32 %v2015, %v2084
    %v2086 = vpop.f32.mrb[0].mxu0
    %2087 = vdwg.mxu0
    %vm2088 = vcmask 386048
    %2089 = vst.msk [vmem:[#allocation4] sm:$0x3] %vm2088, %v2085
    // Predicated region
    $region22: #{tpu_custom_call.1} parent=1 // pred_check
      _
    $region23: #{tpu_custom_call.1} parent=1 // pred_check_branch
      %2091 = sbr.rel (0) target = $region25
    $region24: #{tpu_custom_call.1} parent=1 // pred_region
      %s2093 = ssub.s32 256, 256
      %2094 = vsyncadd [#allocation3], %s2093
      %s2096 = sshll.u32 [#allocation2], 4
      %s2097 = int_to_ptr.vmem [resolvable:$true] %s2096
      %2099 = dma.vmem_to_hbm [thread:$0]  %s2097, 256, %s5, [#allocation3]
    $region25: #{tpu_custom_call.1} parent=1 // pred_fallthru
      _
    // Predicated region
    $region26: #{tpu_custom_call.1} parent=1 // pred_check
      _
    $region27: #{tpu_custom_call.1} parent=1 // pred_check_branch
      %2101 = sbr.rel (0) target = $region29
    $region28: #{tpu_custom_call.1} parent=1 // pred_region
      %s2103 = ssub.s32 32, 32
      %2104 = vsyncadd [#allocation5], %s2103
      %s2106 = sshll.u32 [#allocation4], 4
      %s2107 = int_to_ptr.vmem [resolvable:$true] %s2106
      %2109 = dma.vmem_to_hbm [thread:$0]  %s2107, 32, %s6, [#allocation5]
    $region29: #{tpu_custom_call.1} parent=1 // pred_fallthru
      _
    // Predicated region
    $region30: #{tpu_custom_call.1} parent=1 // pred_check
      _
    $region31: #{tpu_custom_call.1} parent=1 // pred_check_branch
      %2111 = sbr.rel (0) target = $region33
    $region32: #{tpu_custom_call.1} parent=1 // pred_region
      %2112 = dma.done [#allocation3], 256
    $region33: #{tpu_custom_call.1} parent=1 // pred_fallthru
      _
    // Predicated region
    $region34: #{tpu_custom_call.1} parent=1 // pred_check
      _
    $region35: #{tpu_custom_call.1} parent=1 // pred_check_branch
      %2114 = sbr.rel (0) target = $region37
    $region36: #{tpu_custom_call.1} parent=1 // pred_region
      %2115 = dma.done [#allocation5], 32
    $region37: #{tpu_custom_call.1} parent=1 // pred_fallthru
      _
    %2116 = vsyncpa [#allocation3], 1
    %2117 = vsyncpa [#allocation5], 1

</llo_original>
